<compile_context>
chip_gen: v7x
topology: tpu7x:2x2x1
jax: 0.10.0
libtpu: 0.0.40
codegen_flags: <defaults>
</compile_context>

<pallas_src>
import functools

import jax
import jax.numpy as jnp
from jax import lax
from jax.experimental import pallas as pl
from jax.experimental.pallas import tpu as pltpu


def _aa_kernel(x_ref, w1_ref, p_ref, out_ref, xpad, xcol,
               *, H, W, C_in, C_mid, NB, PAD):
    HW = H * W
    L = NB * HW
    halo = W + 1

    # Column-validity masks, shared by all ky taps and all NB elements in this step.
    col = lax.broadcasted_iota(jnp.int32, (C_in, HW), 1) % W
    left_ok = col >= 1           # kx=0 taps read column j-1 -> invalid at j == 0
    right_ok = col <= W - 2      # kx=2 taps read column j+1 -> invalid at j == W-1

    # Zero only the halo strips actually read by the shifted slices.  Re-done every grid
    # step (cheap: 2 x (C_in, W+1)) so correctness does not depend on which TensorCore
    # ran a previous iteration when the "parallel" grid axis is split across cores.
    xpad[:, PAD - halo:PAD] = jnp.zeros((C_in, halo), jnp.float32)
    xpad[:, PAD + HW:PAD + HW + halo] = jnp.zeros((C_in, halo), jnp.float32)

    # ---- im2col: 9 shifted slices per element, stacked on sublanes -> (9*C_in, L) ----
    # Output lane p = i*W + j of element e needs x_flat[p + (ky-1)*W + (kx-1)]; row
    # over/underflow lands in the zero halo, column wrap is masked before the matmul.
    for e in range(NB):
        xpad[:, PAD:PAD + HW] = x_ref[e]            # lane-aligned (PAD=128) interior write
        for ky in range(3):
            for kx in range(3):
                s = PAD + (ky - 1) * W + (kx - 1)   # static lane offset
                xs = xpad[:, s:s + HW]              # (C_in, HW)
                if kx == 0:
                    xs = jnp.where(left_ok, xs, 0.0)
                elif kx == 2:
                    xs = jnp.where(right_ok, xs, 0.0)
                t = ky * 3 + kx
                xcol[t * C_in:(t + 1) * C_in, e * HW:(e + 1) * HW] = xs

    # ---- conv3x3 (C_in -> C_mid): ONE (C_mid, 9*C_in) @ (9*C_in, L) MXU matmul -------
    o1 = p_ref[:, 8:9]                                              # folded bias + BN1
    acc = jnp.dot(w1_ref[...], xcol[...], preferred_element_type=jnp.float32)
    t1 = jnp.maximum(acc + o1, 0.0)                                 # (C_mid, L)

    # ---- ResnetBlockGn(C_mid, k=1) on the VPU: each K=4 conv1x1 = 4 broadcast FMAs ---
    w2 = p_ref[:, 0:4]                                              # (C_mid, C_mid)
    w3 = p_ref[:, 4:8]
    o2 = p_ref[:, 9:10]
    o3 = p_ref[:, 10:11]

    acc2 = jnp.zeros((C_mid, L), jnp.float32) + o2
    for i in range(C_mid):
        acc2 = acc2 + w2[:, i:i + 1] * t1[i:i + 1, :]               # outer-product FMA
    t2 = jnp.maximum(acc2, 0.0)

    acc3 = jnp.zeros((C_mid, L), jnp.float32) + o3
    for i in range(C_mid):
        acc3 = acc3 + w3[:, i:i + 1] * t2[i:i + 1, :]
    y = jnp.maximum(acc3 + t1, 0.0)                                 # residual + ReLU

    # ---- conv1x1 (C_mid -> 1) + sigmoid, as scale + sublane reduce (no M=1 matmul) ---
    w4 = p_ref[:, 11:12]                                            # (C_mid, 1)
    b4 = p_ref[0:1, 12:13]                                          # (1, 1)
    z = jnp.sum(y * w4, axis=0, keepdims=True) + b4                 # (1, L)
    sig = 1.0 / (1.0 + jnp.exp(-z))
    out_ref[0] = sig.reshape(NB, HW).astype(out_ref.dtype)          # sublane-dense slab


def interview_aa_pallas(x, params, *, eps=1e-5):
    """x: (N, C_in, H, W) float32.  Returns (N, 1, H, W) float32."""
    (w1, b1, g1, be1, rm1, rv1,
     w2, b2, g2, be2, rm2, rv2,
     w3, b3, g3, be3, rm3, rv3,
     w4, b4) = params

    N, C_in, H, W = x.shape
    C_mid = w1.shape[0]
    assert w1.shape == (C_mid, C_in, 3, 3)
    HW = H * W
    PAD = 128                                   # lane-aligned interior of padded scratch
    assert W + 1 <= PAD, "in-kernel halo layout assumes W + 1 <= PAD"

    def fold(w, b, g, be, rm, rv):
        s = g / jnp.sqrt(rv + eps)
        return w * s[:, None, None, None], b * s + be - rm * s

    # Fold conv bias + inference-mode BatchNorm into weights / per-channel offsets.
    w1f, o1 = fold(w1, b1, g1, be1, rm1, rv1)
    w2f, o2 = fold(w2, b2, g2, be2, rm2, rv2)
    w3f, o3 = fold(w3, b3, g3, be3, rm3, rv3)

    # w1 flattened tap-major: row o, column (ky*3+kx)*C_in + c  <->  im2col sublane order.
    w1flat = (jnp.transpose(w1f, (0, 2, 3, 1))
              .reshape(C_mid, 9 * C_in).astype(jnp.float32))

    # Single packed (C_mid, 16) parameter tile: one DMA instead of eight tiny ones.
    packed = jnp.zeros((C_mid, 16), jnp.float32)
    packed = packed.at[:, 0:4].set(w2f[:, :, 0, 0])
    packed = packed.at[:, 4:8].set(w3f[:, :, 0, 0])
    packed = packed.at[:, 8].set(o1)
    packed = packed.at[:, 9].set(o2)
    packed = packed.at[:, 10].set(o3)
    packed = packed.at[:, 11].set(w4[0, :, 0, 0])
    packed = packed.at[0, 12].set(b4[0])
    packed = packed.astype(jnp.float32)

    # NB elements per grid step.  Keep >= 2 steps when possible so v7x's two TensorCores
    # both get work; cap NB so the im2col scratch (9*C_in*NB*HW*4B) stays small in VMEM.
    if N <= 1:
        NB = 1
    else:
        NB = min(-(-N // 2), 8)
    G = -(-N // NB)
    N_pad = G * NB

    x_flat = x.reshape(N, C_in, HW).astype(jnp.float32)      # free reshape, no transpose
    if N_pad != N:
        x_flat = jnp.concatenate(
            [x_flat, jnp.zeros((N_pad - N, C_in, HW), jnp.float32)], axis=0)

    kernel = functools.partial(_aa_kernel, H=H, W=W, C_in=C_in, C_mid=C_mid,
                               NB=NB, PAD=PAD)

    out = pl.pallas_call(
        kernel,
        out_shape=jax.ShapeDtypeStruct((G, NB, HW), jnp.float32),
        grid_spec=pltpu.PrefetchScalarGridSpec(
            num_scalar_prefetch=0,
            grid=(G,),
            in_specs=[
                pl.BlockSpec((NB, C_in, HW), lambda g: (g, 0, 0)),       # x (NB, C, HW)
                pl.BlockSpec((C_mid, 9 * C_in), lambda g: (0, 0)),       # w1 folded, flat
                pl.BlockSpec((C_mid, 16), lambda g: (0, 0)),             # packed params
            ],
            out_specs=pl.BlockSpec((1, NB, HW), lambda g: (g, 0, 0)),
            scratch_shapes=[
                pltpu.VMEM((C_in, HW + 2 * PAD), jnp.float32),           # flat padded x
                pltpu.VMEM((9 * C_in, NB * HW), jnp.float32),            # im2col
            ],
        ),
        compiler_params=pltpu.CompilerParams(dimension_semantics=("parallel",)),
    )(x_flat, w1flat, packed)

    return out.reshape(N_pad, HW)[:N].reshape(N, 1, H, W)


def interview_aa_ref(x, params, *, eps=1e-5):
    """Pure-JAX reference (inference-mode BN), NCHW throughout."""
    (w1, b1, g1, be1, rm1, rv1,
     w2, b2, g2, be2, rm2, rv2,
     w3, b3, g3, be3, rm3, rv3,
     w4, b4) = params

    def conv(x, w, b, pad):
        y = lax.conv_general_dilated(
            x, w, window_strides=(1, 1), padding=[(pad, pad), (pad, pad)],
            dimension_numbers=("NCHW", "OIHW", "NCHW"),
            precision=lax.Precision.HIGHEST)
        return y + b.reshape(1, -1, 1, 1)

    def bn(x, g, be, rm, rv):
        return ((x - rm.reshape(1, -1, 1, 1)) / jnp.sqrt(rv.reshape(1, -1, 1, 1) + eps)
                * g.reshape(1, -1, 1, 1) + be.reshape(1, -1, 1, 1))

    t = jax.nn.relu(bn(conv(x, w1, b1, 1), g1, be1, rm1, rv1))          # convgnrelu 32->4
    r = jax.nn.relu(bn(conv(t, w2, b2, 0), g2, be2, rm2, rv2))          # resblock stem[0]
    r = bn(conv(r, w3, b3, 0), g3, be3, rm3, rv3)                       # resblock stem[1:]
    t2 = jax.nn.relu(r + t)                                             # residual + relu
    z = conv(t2, w4, b4, 0)                                             # conv1x1 4->1
    return jax.nn.sigmoid(z)


def make_params(key, c_in=32, c_mid=4):
    ks = jax.random.split(key, 20)

    def bn(k0, k1, k2, k3, c):
        g = 1.0 + 0.1 * jax.random.normal(k0, (c,), jnp.float32)
        be = 0.1 * jax.random.normal(k1, (c,), jnp.float32)
        rm = 0.1 * jax.random.normal(k2, (c,), jnp.float32)
        rv = 0.5 + jnp.abs(jax.random.normal(k3, (c,), jnp.float32)) * 0.2
        return g, be, rm, rv

    w1 = jax.random.normal(ks[0], (c_mid, c_in, 3, 3), jnp.float32) * 0.1
    b1 = jax.random.normal(ks[1], (c_mid,), jnp.float32) * 0.1
    g1, be1, rm1, rv1 = bn(ks[2], ks[3], ks[4], ks[5], c_mid)

    w2 = jax.random.normal(ks[6], (c_mid, c_mid, 1, 1), jnp.float32) * 0.3
    b2 = jax.random.normal(ks[7], (c_mid,), jnp.float32) * 0.1
    g2, be2, rm2, rv2 = bn(ks[8], ks[9], ks[10], ks[11], c_mid)

    w3 = jax.random.normal(ks[12], (c_mid, c_mid, 1, 1), jnp.float32) * 0.3
    b3 = jax.random.normal(ks[13], (c_mid,), jnp.float32) * 0.1
    g3, be3, rm3, rv3 = bn(ks[14], ks[15], ks[16], ks[17], c_mid)

    w4 = jax.random.normal(ks[18], (1, c_mid, 1, 1), jnp.float32) * 0.3
    b4 = jax.random.normal(ks[19], (1,), jnp.float32) * 0.1

    return (w1, b1, g1, be1, rm1, rv1,
            w2, b2, g2, be2, rm2, rv2,
            w3, b3, g3, be3, rm3, rv3,
            w4, b4)


if __name__ == "__main__":
    N, C_in, H, W = 2, 32, 16, 16      # InterViewAAModule default in_channels=32

    key = jax.random.PRNGKey(0)
    kx, kp = jax.random.split(key)
    x = jax.random.normal(kx, (N, C_in, H, W), jnp.float32)
    params = make_params(kp, c_in=C_in, c_mid=4)

    out = interview_aa_pallas(x, params)
    out = jax.block_until_ready(out)

    ref = interview_aa_ref(x, params)
    ref = jax.block_until_ready(ref)

    assert out.shape == (N, 1, H, W)
    assert jnp.allclose(out, ref, atol=1e-4, rtol=1e-4), float(jnp.max(jnp.abs(out - ref)))

    print("KERNEL_OK")
</pallas_src>

<mosaic_0001>
module attributes {stable_mosaic.version = 11 : i64} {
  func.func @_aa_kernel(%arg0: i32, %arg1: memref<1x32x256xf32, #tpu.memory_space<vmem>>, %arg2: memref<4x288xf32, #tpu.memory_space<vmem>>, %arg3: memref<4x16xf32, #tpu.memory_space<vmem>>, %arg4: memref<1x1x256xf32, #tpu.memory_space<vmem>>, %arg5: memref<32x512xf32, #tpu.memory_space<vmem>>, %arg6: memref<288x256xf32, #tpu.memory_space<vmem>>) attributes {dimension_semantics = [#tpu.dimension_semantics<parallel>], iteration_bounds = array<i64: 2>, scalar_prefetch = 0 : i64, scratch_operands = 2 : i64, tpu.core_type = #tpu.core_type<tc>, window_params = [{transform_indices = @transform_0, window_bounds = array<i64: 1, 32, 256>}, {pipeline_mode = #tpu.pipeline_mode<synchronous>, transform_indices = @transform_1, window_bounds = array<i64: 4, 288>}, {pipeline_mode = #tpu.pipeline_mode<synchronous>, transform_indices = @transform_2, window_bounds = array<i64: 4, 16>}, {transform_indices = @transform_3, window_bounds = array<i64: 1, 1, 256>}]} {
    %0 = tpu.iota {dimensions = array<i32: 1>} : vector<32x256xi32>
    %c16_i32 = arith.constant 16 : i32
    %c0_i32 = arith.constant 0 : i32
    %1 = arith.cmpi eq, %c16_i32, %c0_i32 : i32
    %c1_i32 = arith.constant 1 : i32
    %2 = arith.select %1, %c1_i32, %c16_i32 : i32
    %3 = vector.broadcast %2 : i32 to vector<32x256xi32>
    %4 = arith.remsi %0, %3 : vector<32x256xi32>
    %c0_i32_0 = arith.constant 0 : i32
    %5 = vector.broadcast %c0_i32_0 : i32 to vector<32x256xi32>
    %6 = arith.cmpi ne, %4, %5 : vector<32x256xi32>
    %c0_i32_1 = arith.constant 0 : i32
    %7 = vector.broadcast %c0_i32_1 : i32 to vector<32x256xi32>
    %8 = arith.cmpi slt, %4, %7 : vector<32x256xi32>
    %c0_i32_2 = arith.constant 0 : i32
    %9 = arith.cmpi slt, %2, %c0_i32_2 : i32
    %10 = vector.broadcast %9 : i1 to vector<32x256xi1>
    %11 = vector.broadcast %10 : vector<32x256xi1> to vector<32x256xi1>
    %12 = arith.xori %8, %11 : vector<32x256xi1>
    %13 = arith.andi %12, %6 : vector<32x256xi1>
    %14 = vector.broadcast %2 : i32 to vector<32x256xi32>
    %15 = arith.addi %4, %14 : vector<32x256xi32>
    %16 = arith.select %13, %15, %4 : vector<32x256xi1>, vector<32x256xi32>
    %c1_i32_3 = arith.constant 1 : i32
    %17 = vector.broadcast %c1_i32_3 : i32 to vector<32x256xi32>
    %18 = arith.cmpi sge, %16, %17 : vector<32x256xi32>
    %c14_i32 = arith.constant 14 : i32
    %19 = vector.broadcast %c14_i32 : i32 to vector<32x256xi32>
    %20 = arith.cmpi sle, %16, %19 : vector<32x256xi32>
    %cst = arith.constant 0.000000e+00 : f32
    %21 = vector.broadcast %cst : f32 to vector<32x17xf32>
    %c0 = arith.constant 0 : index
    %c111 = arith.constant 111 : index
    %22 = vector.load %arg5[%c0, %c111] : memref<32x512xf32, #tpu.memory_space<vmem>>, vector<32x17xf32>
    tpu.vector_store %arg5[%c0, %c111], %21 {strides = array<i32>} : memref<32x512xf32, #tpu.memory_space<vmem>>, vector<32x17xf32>,
    %cst_4 = arith.constant 0.000000e+00 : f32
    %23 = vector.broadcast %cst_4 : f32 to vector<32x17xf32>
    %c0_5 = arith.constant 0 : index
    %c384 = arith.constant 384 : index
    %24 = vector.load %arg5[%c0_5, %c384] : memref<32x512xf32, #tpu.memory_space<vmem>>, vector<32x17xf32>
    tpu.vector_store %arg5[%c0_5, %c384], %23 {strides = array<i32>} : memref<32x512xf32, #tpu.memory_space<vmem>>, vector<32x17xf32>,
    %c0_6 = arith.constant 0 : index
    %c0_7 = arith.constant 0 : index
    %c0_8 = arith.constant 0 : index
    %25 = vector.load %arg1[%c0_6, %c0_7, %c0_8] : memref<1x32x256xf32, #tpu.memory_space<vmem>>, vector<1x32x256xf32>
    %26 = vector.shape_cast %25 : vector<1x32x256xf32> to vector<32x256xf32>
    %c0_9 = arith.constant 0 : index
    %c128 = arith.constant 128 : index
    %27 = vector.load %arg5[%c0_9, %c128] : memref<32x512xf32, #tpu.memory_space<vmem>>, vector<32x256xf32>
    tpu.vector_store %arg5[%c0_9, %c128], %26 {strides = array<i32>} : memref<32x512xf32, #tpu.memory_space<vmem>>, vector<32x256xf32>,
    %c0_10 = arith.constant 0 : index
    %c111_11 = arith.constant 111 : index
    %28 = vector.load %arg5[%c0_10, %c111_11] : memref<32x512xf32, #tpu.memory_space<vmem>>, vector<32x256xf32>
    %cst_12 = arith.constant 0.000000e+00 : f32
    %29 = vector.broadcast %cst_12 : f32 to vector<32x256xf32>
    %30 = arith.select %18, %28, %29 : vector<32x256xi1>, vector<32x256xf32>
    %c0_13 = arith.constant 0 : index
    %c0_14 = arith.constant 0 : index
    %31 = vector.load %arg6[%c0_13, %c0_14] : memref<288x256xf32, #tpu.memory_space<vmem>>, vector<32x256xf32>
    tpu.vector_store %arg6[%c0_13, %c0_14], %30 {strides = array<i32>} : memref<288x256xf32, #tpu.memory_space<vmem>>, vector<32x256xf32>,
    %c0_15 = arith.constant 0 : index
    %c112 = arith.constant 112 : index
    %32 = vector.load %arg5[%c0_15, %c112] : memref<32x512xf32, #tpu.memory_space<vmem>>, vector<32x256xf32>
    %c32 = arith.constant 32 : index
    %c0_16 = arith.constant 0 : index
    %33 = vector.load %arg6[%c32, %c0_16] : memref<288x256xf32, #tpu.memory_space<vmem>>, vector<32x256xf32>
    tpu.vector_store %arg6[%c32, %c0_16], %32 {strides = array<i32>} : memref<288x256xf32, #tpu.memory_space<vmem>>, vector<32x256xf32>,
    %c0_17 = arith.constant 0 : index
    %c113 = arith.constant 113 : index
    %34 = vector.load %arg5[%c0_17, %c113] : memref<32x512xf32, #tpu.memory_space<vmem>>, vector<32x256xf32>
    %cst_18 = arith.constant 0.000000e+00 : f32
    %35 = vector.broadcast %cst_18 : f32 to vector<32x256xf32>
    %36 = arith.select %20, %34, %35 : vector<32x256xi1>, vector<32x256xf32>
    %c64 = arith.constant 64 : index
    %c0_19 = arith.constant 0 : index
    %37 = vector.load %arg6[%c64, %c0_19] : memref<288x256xf32, #tpu.memory_space<vmem>>, vector<32x256xf32>
    tpu.vector_store %arg6[%c64, %c0_19], %36 {strides = array<i32>} : memref<288x256xf32, #tpu.memory_space<vmem>>, vector<32x256xf32>,
    %c0_20 = arith.constant 0 : index
    %c127 = arith.constant 127 : index
    %38 = vector.load %arg5[%c0_20, %c127] : memref<32x512xf32, #tpu.memory_space<vmem>>, vector<32x256xf32>
    %cst_21 = arith.constant 0.000000e+00 : f32
    %39 = vector.broadcast %cst_21 : f32 to vector<32x256xf32>
    %40 = arith.select %18, %38, %39 : vector<32x256xi1>, vector<32x256xf32>
    %c96 = arith.constant 96 : index
    %c0_22 = arith.constant 0 : index
    %41 = vector.load %arg6[%c96, %c0_22] : memref<288x256xf32, #tpu.memory_space<vmem>>, vector<32x256xf32>
    tpu.vector_store %arg6[%c96, %c0_22], %40 {strides = array<i32>} : memref<288x256xf32, #tpu.memory_space<vmem>>, vector<32x256xf32>,
    %c0_23 = arith.constant 0 : index
    %c128_24 = arith.constant 128 : index
    %42 = vector.load %arg5[%c0_23, %c128_24] : memref<32x512xf32, #tpu.memory_space<vmem>>, vector<32x256xf32>
    %c128_25 = arith.constant 128 : index
    %c0_26 = arith.constant 0 : index
    %43 = vector.load %arg6[%c128_25, %c0_26] : memref<288x256xf32, #tpu.memory_space<vmem>>, vector<32x256xf32>
    tpu.vector_store %arg6[%c128_25, %c0_26], %42 {strides = array<i32>} : memref<288x256xf32, #tpu.memory_space<vmem>>, vector<32x256xf32>,
    %c0_27 = arith.constant 0 : index
    %c129 = arith.constant 129 : index
    %44 = vector.load %arg5[%c0_27, %c129] : memref<32x512xf32, #tpu.memory_space<vmem>>, vector<32x256xf32>
    %cst_28 = arith.constant 0.000000e+00 : f32
    %45 = vector.broadcast %cst_28 : f32 to vector<32x256xf32>
    %46 = arith.select %20, %44, %45 : vector<32x256xi1>, vector<32x256xf32>
    %c160 = arith.constant 160 : index
    %c0_29 = arith.constant 0 : index
    %47 = vector.load %arg6[%c160, %c0_29] : memref<288x256xf32, #tpu.memory_space<vmem>>, vector<32x256xf32>
    tpu.vector_store %arg6[%c160, %c0_29], %46 {strides = array<i32>} : memref<288x256xf32, #tpu.memory_space<vmem>>, vector<32x256xf32>,
    %c0_30 = arith.constant 0 : index
    %c143 = arith.constant 143 : index
    %48 = vector.load %arg5[%c0_30, %c143] : memref<32x512xf32, #tpu.memory_space<vmem>>, vector<32x256xf32>
    %cst_31 = arith.constant 0.000000e+00 : f32
    %49 = vector.broadcast %cst_31 : f32 to vector<32x256xf32>
    %50 = arith.select %18, %48, %49 : vector<32x256xi1>, vector<32x256xf32>
    %c192 = arith.constant 192 : index
    %c0_32 = arith.constant 0 : index
    %51 = vector.load %arg6[%c192, %c0_32] : memref<288x256xf32, #tpu.memory_space<vmem>>, vector<32x256xf32>
    tpu.vector_store %arg6[%c192, %c0_32], %50 {strides = array<i32>} : memref<288x256xf32, #tpu.memory_space<vmem>>, vector<32x256xf32>,
    %c0_33 = arith.constant 0 : index
    %c144 = arith.constant 144 : index
    %52 = vector.load %arg5[%c0_33, %c144] : memref<32x512xf32, #tpu.memory_space<vmem>>, vector<32x256xf32>
    %c224 = arith.constant 224 : index
    %c0_34 = arith.constant 0 : index
    %53 = vector.load %arg6[%c224, %c0_34] : memref<288x256xf32, #tpu.memory_space<vmem>>, vector<32x256xf32>
    tpu.vector_store %arg6[%c224, %c0_34], %52 {strides = array<i32>} : memref<288x256xf32, #tpu.memory_space<vmem>>, vector<32x256xf32>,
    %c0_35 = arith.constant 0 : index
    %c145 = arith.constant 145 : index
    %54 = vector.load %arg5[%c0_35, %c145] : memref<32x512xf32, #tpu.memory_space<vmem>>, vector<32x256xf32>
    %cst_36 = arith.constant 0.000000e+00 : f32
    %55 = vector.broadcast %cst_36 : f32 to vector<32x256xf32>
    %56 = arith.select %20, %54, %55 : vector<32x256xi1>, vector<32x256xf32>
    %c256 = arith.constant 256 : index
    %c0_37 = arith.constant 0 : index
    %57 = vector.load %arg6[%c256, %c0_37] : memref<288x256xf32, #tpu.memory_space<vmem>>, vector<32x256xf32>
    tpu.vector_store %arg6[%c256, %c0_37], %56 {strides = array<i32>} : memref<288x256xf32, #tpu.memory_space<vmem>>, vector<32x256xf32>,
    %c0_38 = arith.constant 0 : index
    %c8 = arith.constant 8 : index
    %58 = vector.load %arg3[%c0_38, %c8] : memref<4x16xf32, #tpu.memory_space<vmem>>, vector<4x1xf32>
    %c0_39 = arith.constant 0 : index
    %c0_40 = arith.constant 0 : index
    %59 = vector.load %arg2[%c0_39, %c0_40] : memref<4x288xf32, #tpu.memory_space<vmem>>, vector<4x288xf32>
    %c0_41 = arith.constant 0 : index
    %c0_42 = arith.constant 0 : index
    %60 = vector.load %arg6[%c0_41, %c0_42] : memref<288x256xf32, #tpu.memory_space<vmem>>, vector<288x256xf32>
    %cst_43 = arith.constant dense<0.000000e+00> : vector<4x256xf32>
    %61 = tpu.matmul %59, %60, %cst_43 {dimension_numbers = #tpu.dot_dimension_numbers<[1], [0], [0], [1], [0, 0, 1, 1], [], []>} : vector<4x288xf32>, vector<288x256xf32>, vector<4x256xf32> -> vector<4x256xf32>
    %62 = vector.broadcast %58 : vector<4x1xf32> to vector<4x256xf32>
    %63 = arith.addf %61, %62 : vector<4x256xf32>
    %cst_44 = arith.constant 0.000000e+00 : f32
    %64 = vector.broadcast %cst_44 : f32 to vector<4x256xf32>
    %65 = arith.maximumf %63, %64 : vector<4x256xf32>
    %c0_45 = arith.constant 0 : index
    %c0_46 = arith.constant 0 : index
    %66 = vector.load %arg3[%c0_45, %c0_46] : memref<4x16xf32, #tpu.memory_space<vmem>>, vector<4x4xf32>
    %c0_47 = arith.constant 0 : index
    %c4 = arith.constant 4 : index
    %67 = vector.load %arg3[%c0_47, %c4] : memref<4x16xf32, #tpu.memory_space<vmem>>, vector<4x4xf32>
    %c0_48 = arith.constant 0 : index
    %c9 = arith.constant 9 : index
    %68 = vector.load %arg3[%c0_48, %c9] : memref<4x16xf32, #tpu.memory_space<vmem>>, vector<4x1xf32>
    %c0_49 = arith.constant 0 : index
    %c10 = arith.constant 10 : index
    %69 = vector.load %arg3[%c0_49, %c10] : memref<4x16xf32, #tpu.memory_space<vmem>>, vector<4x1xf32>
    %cst_50 = arith.constant 0.000000e+00 : f32
    %70 = vector.broadcast %cst_50 : f32 to vector<4x256xf32>
    %71 = vector.broadcast %68 : vector<4x1xf32> to vector<4x256xf32>
    %72 = arith.addf %70, %71 : vector<4x256xf32>
    %73 = vector.extract_strided_slice %66 {offsets = [0, 0], sizes = [4, 1], strides = [1, 1]} : vector<4x4xf32> to vector<4x1xf32>
    %74 = vector.extract_strided_slice %65 {offsets = [0, 0], sizes = [1, 256], strides = [1, 1]} : vector<4x256xf32> to vector<1x256xf32>
    %75 = vector.broadcast %73 : vector<4x1xf32> to vector<4x256xf32>
    %76 = vector.broadcast %74 : vector<1x256xf32> to vector<4x256xf32>
    %77 = arith.mulf %75, %76 : vector<4x256xf32>
    %78 = arith.addf %72, %77 : vector<4x256xf32>
    %79 = vector.extract_strided_slice %66 {offsets = [0, 1], sizes = [4, 1], strides = [1, 1]} : vector<4x4xf32> to vector<4x1xf32>
    %80 = vector.extract_strided_slice %65 {offsets = [1, 0], sizes = [1, 256], strides = [1, 1]} : vector<4x256xf32> to vector<1x256xf32>
    %81 = vector.broadcast %79 : vector<4x1xf32> to vector<4x256xf32>
    %82 = vector.broadcast %80 : vector<1x256xf32> to vector<4x256xf32>
    %83 = arith.mulf %81, %82 : vector<4x256xf32>
    %84 = arith.addf %78, %83 : vector<4x256xf32>
    %85 = vector.extract_strided_slice %66 {offsets = [0, 2], sizes = [4, 1], strides = [1, 1]} : vector<4x4xf32> to vector<4x1xf32>
    %86 = vector.extract_strided_slice %65 {offsets = [2, 0], sizes = [1, 256], strides = [1, 1]} : vector<4x256xf32> to vector<1x256xf32>
    %87 = vector.broadcast %85 : vector<4x1xf32> to vector<4x256xf32>
    %88 = vector.broadcast %86 : vector<1x256xf32> to vector<4x256xf32>
    %89 = arith.mulf %87, %88 : vector<4x256xf32>
    %90 = arith.addf %84, %89 : vector<4x256xf32>
    %91 = vector.extract_strided_slice %66 {offsets = [0, 3], sizes = [4, 1], strides = [1, 1]} : vector<4x4xf32> to vector<4x1xf32>
    %92 = vector.extract_strided_slice %65 {offsets = [3, 0], sizes = [1, 256], strides = [1, 1]} : vector<4x256xf32> to vector<1x256xf32>
    %93 = vector.broadcast %91 : vector<4x1xf32> to vector<4x256xf32>
    %94 = vector.broadcast %92 : vector<1x256xf32> to vector<4x256xf32>
    %95 = arith.mulf %93, %94 : vector<4x256xf32>
    %96 = arith.addf %90, %95 : vector<4x256xf32>
    %cst_51 = arith.constant 0.000000e+00 : f32
    %97 = vector.broadcast %cst_51 : f32 to vector<4x256xf32>
    %98 = arith.maximumf %96, %97 : vector<4x256xf32>
    %cst_52 = arith.constant 0.000000e+00 : f32
    %99 = vector.broadcast %cst_52 : f32 to vector<4x256xf32>
    %100 = vector.broadcast %69 : vector<4x1xf32> to vector<4x256xf32>
    %101 = arith.addf %99, %100 : vector<4x256xf32>
    %102 = vector.extract_strided_slice %67 {offsets = [0, 0], sizes = [4, 1], strides = [1, 1]} : vector<4x4xf32> to vector<4x1xf32>
    %103 = vector.extract_strided_slice %98 {offsets = [0, 0], sizes = [1, 256], strides = [1, 1]} : vector<4x256xf32> to vector<1x256xf32>
    %104 = vector.broadcast %102 : vector<4x1xf32> to vector<4x256xf32>
    %105 = vector.broadcast %103 : vector<1x256xf32> to vector<4x256xf32>
    %106 = arith.mulf %104, %105 : vector<4x256xf32>
    %107 = arith.addf %101, %106 : vector<4x256xf32>
    %108 = vector.extract_strided_slice %67 {offsets = [0, 1], sizes = [4, 1], strides = [1, 1]} : vector<4x4xf32> to vector<4x1xf32>
    %109 = vector.extract_strided_slice %98 {offsets = [1, 0], sizes = [1, 256], strides = [1, 1]} : vector<4x256xf32> to vector<1x256xf32>
    %110 = vector.broadcast %108 : vector<4x1xf32> to vector<4x256xf32>
    %111 = vector.broadcast %109 : vector<1x256xf32> to vector<4x256xf32>
    %112 = arith.mulf %110, %111 : vector<4x256xf32>
    %113 = arith.addf %107, %112 : vector<4x256xf32>
    %114 = vector.extract_strided_slice %67 {offsets = [0, 2], sizes = [4, 1], strides = [1, 1]} : vector<4x4xf32> to vector<4x1xf32>
    %115 = vector.extract_strided_slice %98 {offsets = [2, 0], sizes = [1, 256], strides = [1, 1]} : vector<4x256xf32> to vector<1x256xf32>
    %116 = vector.broadcast %114 : vector<4x1xf32> to vector<4x256xf32>
    %117 = vector.broadcast %115 : vector<1x256xf32> to vector<4x256xf32>
    %118 = arith.mulf %116, %117 : vector<4x256xf32>
    %119 = arith.addf %113, %118 : vector<4x256xf32>
    %120 = vector.extract_strided_slice %67 {offsets = [0, 3], sizes = [4, 1], strides = [1, 1]} : vector<4x4xf32> to vector<4x1xf32>
    %121 = vector.extract_strided_slice %98 {offsets = [3, 0], sizes = [1, 256], strides = [1, 1]} : vector<4x256xf32> to vector<1x256xf32>
    %122 = vector.broadcast %120 : vector<4x1xf32> to vector<4x256xf32>
    %123 = vector.broadcast %121 : vector<1x256xf32> to vector<4x256xf32>
    %124 = arith.mulf %122, %123 : vector<4x256xf32>
    %125 = arith.addf %119, %124 : vector<4x256xf32>
    %126 = arith.addf %125, %65 : vector<4x256xf32>
    %cst_53 = arith.constant 0.000000e+00 : f32
    %127 = vector.broadcast %cst_53 : f32 to vector<4x256xf32>
    %128 = arith.maximumf %126, %127 : vector<4x256xf32>
    %c0_54 = arith.constant 0 : index
    %c11 = arith.constant 11 : index
    %129 = vector.load %arg3[%c0_54, %c11] : memref<4x16xf32, #tpu.memory_space<vmem>>, vector<4x1xf32>
    %c0_55 = arith.constant 0 : index
    %c12 = arith.constant 12 : index
    %130 = vector.load %arg3[%c0_55, %c12] : memref<4x16xf32, #tpu.memory_space<vmem>>, vector<1x1xf32>
    %131 = vector.broadcast %129 : vector<4x1xf32> to vector<4x256xf32>
    %132 = arith.mulf %128, %131 : vector<4x256xf32>
    %cst_56 = arith.constant dense<0.000000e+00> : vector<256xf32>
    %133 = vector.multi_reduction <add>, %132, %cst_56 [0] : vector<4x256xf32> to vector<256xf32>
    %134 = vector.shape_cast %133 : vector<256xf32> to vector<1x256xf32>
    %135 = vector.broadcast %130 : vector<1x1xf32> to vector<1x256xf32>
    %136 = arith.addf %134, %135 : vector<1x256xf32>
    %cst_57 = arith.constant 0.000000e+00 : f32
    %137 = vector.broadcast %cst_57 : f32 to vector<1x256xf32>
    %138 = arith.subf %137, %136 : vector<1x256xf32>
    %139 = math.exp %138 : vector<1x256xf32>
    %cst_58 = arith.constant 1.000000e+00 : f32
    %140 = vector.broadcast %cst_58 : f32 to vector<1x256xf32>
    %141 = arith.addf %140, %139 : vector<1x256xf32>
    %cst_59 = arith.constant 1.000000e+00 : f32
    %142 = vector.broadcast %cst_59 : f32 to vector<1x256xf32>
    %143 = arith.divf %142, %141 : vector<1x256xf32>
    %c0_60 = arith.constant 0 : index
    %c0_61 = arith.constant 0 : index
    %c0_62 = arith.constant 0 : index
    %144 = vector.load %arg4[%c0_60, %c0_61, %c0_62] : memref<1x1x256xf32, #tpu.memory_space<vmem>>, vector<1x1x256xf32>
    %145 = vector.shape_cast %144 : vector<1x1x256xf32> to vector<1x256xf32>
    %146 = vector.shape_cast %143 : vector<1x256xf32> to vector<1x1x256xf32>
    tpu.vector_store %arg4[%c0_60, %c0_61, %c0_62], %146 {strides = array<i32>} : memref<1x1x256xf32, #tpu.memory_space<vmem>>, vector<1x1x256xf32>,
    return
  }
  func.func @transform_0(%arg0: i32) -> (i32, i32, i32) {
    %c0_i32 = arith.constant 0 : i32
    %c0_i32_0 = arith.constant 0 : i32
    %c0_i32_1 = arith.constant 0 : i32
    return %arg0, %c0_i32, %c0_i32_0 : i32, i32, i32
  }
  func.func @transform_1(%arg0: i32) -> (i32, i32) {
    %c0_i32 = arith.constant 0 : i32
    %c0_i32_0 = arith.constant 0 : i32
    %c0_i32_1 = arith.constant 0 : i32
    return %c0_i32, %c0_i32_0 : i32, i32
  }
  func.func @transform_2(%arg0: i32) -> (i32, i32) {
    %c0_i32 = arith.constant 0 : i32
    %c0_i32_0 = arith.constant 0 : i32
    %c0_i32_1 = arith.constant 0 : i32
    return %c0_i32, %c0_i32_0 : i32, i32
  }
  func.func @transform_3(%arg0: i32) -> (i32, i32, i32) {
    %c0_i32 = arith.constant 0 : i32
    %c0_i32_0 = arith.constant 0 : i32
    %c0_i32_1 = arith.constant 0 : i32
    return %arg0, %c0_i32, %c0_i32_0 : i32, i32, i32
  }
}

</mosaic_0001>

<llo_original>
// kernel: tpu_custom_call.1
$region0: #{tpu_custom_call.1}
  #allocation0 [shape = 'u32[]', space=smem, size = 0x4, offset = 0x4, fixed_abs, tag = 'smem constant byte address 0x4 - core index']
  #allocation1 [shape = 'u32[144,128]{1,0:T(1,128)}', space=vmem, size = 0x12000, scoped, tag = 'internal scratch']
  #allocation2 [shape = 'f32[32,512]{1,0:T(8,128)}', space=vmem, size = 0x10000, scoped, tag = 'scratch operand']
  #allocation3 [shape = 'f32[288,256]{1,0:T(8,128)}', space=vmem, size = 0x48000, scoped, tag = 'scratch operand']
  %s0 = inlined_call_operand.hbm [shape: f32[2,32,256], index: 0, kind: input, shape index: {}]
  %s1 = inlined_call_operand.hbm [shape: f32[4,288], index: 1, kind: input, shape index: {}]
  %s2 = inlined_call_operand.vmem [shape: f32[4,16], index: 2, kind: input, shape index: {}]
  %s3 = inlined_call_operand.hbm [shape: f32[2,1,256], index: 3, kind: output, shape index: {}]
  %s4 = sld [smem:[#allocation0]]
  $region53: #{tpu_custom_call.1} parent=0
    _
  %s6 = ssub.s32 1, %s4
  %s7 = scalar_select 0, %s6, %s4
  $region1: #{tpu_custom_call.1} parent=0
    #allocation4 [shape = 'u8[65536]{0}', space=vmem, size = 0x10000, scoped, tag = 'input window, operand 0']
    #allocation5 [shape = 's32[2]{0}', space=sflag, size = 0x8, scoped, tag = 'scoped memory for tpu_custom_call.1']
    #allocation6 [shape = 's32[2]{0}', space=sflag, size = 0x8, scoped, tag = 'scoped memory for tpu_custom_call.1']
    #allocation7 [shape = 'u8[6144]{0}', space=vmem, size = 0x1800, scoped, tag = 'input window, operand 1, single buffered']
    #allocation8 [shape = 's32[1]{0}', space=sflag, size = 0x4, scoped, tag = 'scoped memory for tpu_custom_call.1']
    #allocation9 [shape = 'u8[2048]{0}', space=vmem, size = 0x800, scoped, tag = 'output window, operand 0']
    %8 = vsyncpa [#allocation5], 0
    %s9 = scalar_lea.sflag [#allocation5], 1
    %10 = vsyncpa %s9, 0
    %11 = vsyncpa [#allocation8], 0
    %12 = vsyncpa [#allocation6], 0
    %s13 = scalar_lea.sflag [#allocation6], 1
    %14 = vsyncpa %s13, 0
    loop: start=0, step=1, limit=4
    $region2: #{tpu_custom_call.1} parent=1 // loop_pre_header
      _
    $region3: #{tpu_custom_call.1} parent=1 // loop_header
      %s16 = sphi 0, %s20
      %p17 = scmp.ge.s32.totalorder %s16, 4
      %s26 = sphi 0, %s28
      %s29 = sphi 0, %s26
      %s30 = sphi 0, %s29
      %s46 = sphi 0, %s30
      %s50 = sphi 0, %s50
      %s52 = sphi 0, %s50
      %s53 = sphi 0, %s52
      %s67 = sphi 0, %s53
      %s71 = sphi 0, %s71
      %s73 = sphi 0, %s71
      %s74 = sphi 0, %s73
      %s88 = sphi 0, %s74
      %s94 = sphi 0, %s96
      %s97 = sphi 0, %s94
      %s98 = sphi 0, %s97
      %s114 = sphi 0, %s98
    $region4: #{tpu_custom_call.1} parent=1 // loop_header_branch
      %19 = sbr.rel (%p17) target = $region8
    $region5: #{tpu_custom_call.1} parent=1 // loop_body
      %s21 = ssub.s32 %s16, 1
      %s22 = ssub.s32 %s16, 2
      %s23 = sadd.s32 %s16, 1
      %s24 = ssub.s32 %s16, %s23
      %p25 = scmp.eq.s32.totalorder %s24, 0
      %s27 = sadd.s32 %s26, 1
      %s28 = scalar_select %p25, %s26, %s27
      %p31 = pneg %p25
      %p32 = scmp.eq.s32.totalorder %s16, 1
      %p33 = por %p31, %p32
      %p34 = scmp.ne.s32.totalorder %s26, %s29
      %p35 = scmp.eq.s32.totalorder %s16, 0
      %p36 = por %p34, %p35
      %p37 = scmp.ne.s32.totalorder %s26, %s29
      %p38 = scmp.eq.s32.totalorder %s21, 1
      %p39 = por %p37, %p38
      %p40 = scmp.ne.s32.totalorder %s29, %s30
      %p41 = scmp.eq.s32.totalorder %s21, 0
      %p42 = por %p40, %p41
      %p43 = scmp.ne.s32.totalorder %s29, %s30
      %p44 = scmp.eq.s32.totalorder %s22, 1
      %p45 = por %p43, %p44
      %p47 = scmp.ne.s32.totalorder %s30, %s46
      %p48 = scmp.eq.s32.totalorder %s22, 0
      %p49 = por %p47, %p48
      %s51 = sadd.s32 %s50, 1
      %p54 = scmp.eq.s32.totalorder %s16, 1
      %p55 = scmp.ne.s32.totalorder %s50, %s52
      %p56 = scmp.eq.s32.totalorder %s16, 0
      %p57 = por %p55, %p56
      %p58 = scmp.ne.s32.totalorder %s50, %s52
      %p59 = scmp.eq.s32.totalorder %s21, 1
      %p60 = por %p58, %p59
      %p61 = scmp.ne.s32.totalorder %s52, %s53
      %p62 = scmp.eq.s32.totalorder %s21, 0
      %p63 = por %p61, %p62
      %p64 = scmp.ne.s32.totalorder %s52, %s53
      %p65 = scmp.eq.s32.totalorder %s22, 1
      %p66 = por %p64, %p65
      %p68 = scmp.ne.s32.totalorder %s53, %s67
      %p69 = scmp.eq.s32.totalorder %s22, 0
      %p70 = por %p68, %p69
      %s72 = sadd.s32 %s71, 1
      %p75 = scmp.eq.s32.totalorder %s16, 1
      %p76 = scmp.ne.s32.totalorder %s71, %s73
      %p77 = scmp.eq.s32.totalorder %s16, 0
      %p78 = por %p76, %p77
      %p79 = scmp.ne.s32.totalorder %s71, %s73
      %p80 = scmp.eq.s32.totalorder %s21, 1
      %p81 = por %p79, %p80
      %p82 = scmp.ne.s32.totalorder %s73, %s74
      %p83 = scmp.eq.s32.totalorder %s21, 0
      %p84 = por %p82, %p83
      %p85 = scmp.ne.s32.totalorder %s73, %s74
      %p86 = scmp.eq.s32.totalorder %s22, 1
      %p87 = por %p85, %p86
      %p89 = scmp.ne.s32.totalorder %s74, %s88
      %p90 = scmp.eq.s32.totalorder %s22, 0
      %p91 = por %p89, %p90
      %s92 = ssub.s32 %s16, %s23
      %p93 = scmp.eq.s32.totalorder %s92, 0
      %s95 = sadd.s32 %s94, 1
      %s96 = scalar_select %p93, %s94, %s95
      %p99 = pneg %p93
      %p100 = scmp.eq.s32.totalorder %s16, 1
      %p101 = por %p99, %p100
      %p102 = scmp.ne.s32.totalorder %s94, %s97
      %p103 = scmp.eq.s32.totalorder %s16, 0
      %p104 = por %p102, %p103
      %p105 = scmp.ne.s32.totalorder %s94, %s97
      %p106 = scmp.eq.s32.totalorder %s21, 1
      %p107 = por %p105, %p106
      %p108 = scmp.ne.s32.totalorder %s97, %s98
      %p109 = scmp.eq.s32.totalorder %s21, 0
      %p110 = por %p108, %p109
      %p111 = scmp.ne.s32.totalorder %s97, %s98
      %p112 = scmp.eq.s32.totalorder %s22, 1
      %p113 = por %p111, %p112
      %p115 = scmp.ne.s32.totalorder %s98, %s114
      %p116 = scmp.eq.s32.totalorder %s22, 0
      %p117 = por %p115, %p116
      %p118 = scmp.le.s32.totalorder 1, %s16
      %p119 = scmp.lt.s32.totalorder %s16, 3
      %p120 = pnand %p118, %p119
      %p121 = pneg %p120
      // Predicated region
      $region9: #{tpu_custom_call.1} parent=5 // pred_check
        _
      $region10: #{tpu_custom_call.1} parent=5 // pred_check_branch
        %123 = sbr.rel (%p120) target = $region12
      $region11: #{tpu_custom_call.1} parent=5 // pred_region
        %s124 = ssub.s32 %s16, 1
        // Predicated region
        $region13: #{tpu_custom_call.1} parent=11 // pred_check
          %p125 = pneg %p63
        $region14: #{tpu_custom_call.1} parent=11 // pred_check_branch
          %127 = sbr.rel (%p125) target = $region16
        $region15: #{tpu_custom_call.1} parent=11 // pred_region
          %s129 = ssub.s32 192, 192
          %130 = vsyncadd [#allocation8], %s129
          %s132 = sshll.u32 [#allocation7], 4
          %s133 = int_to_ptr.vmem [resolvable:$true] %s132
          %135 = dma.hbm_to_vmem [thread:$0]  %s1, 192, %s133, [#allocation8]
        $region16: #{tpu_custom_call.1} parent=11 // pred_fallthru
          _
        // Predicated region
        $region17: #{tpu_custom_call.1} parent=11 // pred_check
          %p136 = pneg %p84
        $region18: #{tpu_custom_call.1} parent=11 // pred_check_branch
          %138 = sbr.rel (%p136) target = $region20
        $region19: #{tpu_custom_call.1} parent=11 // pred_region
          _
        $region20: #{tpu_custom_call.1} parent=11 // pred_fallthru
          _
      $region12: #{tpu_custom_call.1} parent=5 // pred_fallthru
        _
      %p139 = scmp.lt.s32.totalorder %s16, 2
      // Predicated region
      $region21: #{tpu_custom_call.1} parent=5 // pred_check
        %p140 = pneg %p139
      $region22: #{tpu_custom_call.1} parent=5 // pred_check_branch
        %142 = sbr.rel (%p140) target = $region24
      $region23: #{tpu_custom_call.1} parent=5 // pred_region
        // Predicated region
        $region25: #{tpu_custom_call.1} parent=23 // pred_check
          %p143 = pneg %p36
        $region26: #{tpu_custom_call.1} parent=23 // pred_check_branch
          %145 = sbr.rel (%p143) target = $region28
        $region27: #{tpu_custom_call.1} parent=23 // pred_region
          %s146 = sand.u32 %s26, 1
          %s147 = scalar_lea.sflag [#allocation5], %s146
          %s148 = sand.u32 %s26, 1
          %s149 = smul.addr %s148, 64
          %s150 = scalar_lea.vmem [#allocation4], %s149
          %s152 = ssub.s32 1024, 1024
          %153 = vsyncadd %s147, %s152
          %s154 = smul.addr %s16, 8
          %s155 = smul.addr %s154, 128
          %s156 = scalar_lea.hbm %s0, %s155
          %s157 = sshll.u32 %s150, 4
          %s158 = int_to_ptr.vmem [resolvable:$true] %s157
          %163 = dma.hbm_to_vmem [thread:$0]  %s156, 1024, %s158, %s147, 256, 256, 16
        $region28: #{tpu_custom_call.1} parent=23 // pred_fallthru
          _
      $region24: #{tpu_custom_call.1} parent=5 // pred_fallthru
        _
      %p164 = scmp.le.s32.totalorder 1, %s16
      %p165 = scmp.lt.s32.totalorder %s16, 3
      %p166 = pnand %p164, %p165
      %p167 = pneg %p166
      // Predicated region
      $region29: #{tpu_custom_call.1} parent=5 // pred_check
        _
      $region30: #{tpu_custom_call.1} parent=5 // pred_check_branch
        %169 = sbr.rel (%p166) target = $region32
      $region31: #{tpu_custom_call.1} parent=5 // pred_region
        %s170 = ssub.s32 %s16, 1
        %s171 = sand.u32 %s29, 1
        %s172 = scalar_lea.sflag [#allocation5], %s171
        %s173 = sand.u32 %s29, 1
        %s174 = smul.addr %s173, 64
        %s175 = scalar_lea.vmem [#allocation4], %s174
        // Predicated region
        $region33: #{tpu_custom_call.1} parent=31 // pred_check
          %p176 = pneg %p42
        $region34: #{tpu_custom_call.1} parent=31 // pred_check_branch
          %178 = sbr.rel (%p176) target = $region36
        $region35: #{tpu_custom_call.1} parent=31 // pred_region
          %179 = dma.done %s172, 1024
        $region36: #{tpu_custom_call.1} parent=31 // pred_fallthru
          _
        // Predicated region
        $region37: #{tpu_custom_call.1} parent=31 // pred_check
          %p180 = pneg %p63
        $region38: #{tpu_custom_call.1} parent=31 // pred_check_branch
          %182 = sbr.rel (%p180) target = $region40
        $region39: #{tpu_custom_call.1} parent=31 // pred_region
          %183 = dma.done [#allocation8], 192
        $region40: #{tpu_custom_call.1} parent=31 // pred_fallthru
          _
        %s184 = sand.u32 %s29, 1
        %s185 = scalar_lea.sflag [#allocation5], %s184
        %s186 = sand.u32 %s29, 1
        %s187 = smul.addr %s186, 64
        %s188 = scalar_lea.vmem [#allocation4], %s187
        %p189 = pneg %p42
        %p190 = pneg %p39
        %p191 = pneg %p63
        %p192 = pneg %p60
        %p193 = pneg %p84
        %p194 = pneg %p81
        %p195 = pneg %p110
        %p196 = pneg %p107
        %s197 = sand.u32 %s97, 1
        %s198 = scalar_lea.sflag [#allocation6], %s197
        %s199 = sand.u32 %s97, 1
        %s200 = smul.addr %s199, 2
        %s201 = scalar_lea.vmem [#allocation9], %s200
        %v202 = vlaneseq
        %v203 = vand.u32 %v202, 127
        %v204 = vadd.s32 %v203, 128
        %vm205 = vcmp.lt.s32.totalorder %v203, 0
        %v206 = vsub.s32 0, %v203
        %v207 = vsel %vm205, %v206, %v203
        %v208 = vshrl.u32 %v207, 4
        %v209 = vand.u32 %v207, 15
        %v210 = vsub.s32 0, %v209
        %v211 = vsel %vm205, %v210, %v209
        %vm212 = vcmp.lt.s32.totalorder %v204, 0
        %v213 = vsub.s32 0, %v204
        %v214 = vsel %vm212, %v213, %v204
        %v215 = vshrl.u32 %v214, 4
        %v216 = vand.u32 %v214, 15
        %v217 = vsub.s32 0, %v216
        %v218 = vsel %vm212, %v217, %v216
        %vm219 = vcmp.ne.s32.totalorder %v211, 0
        %vm220 = vcmp.ne.s32.totalorder %v218, 0
        %vm221 = vcmp.lt.s32.totalorder %v211, 0
        %vm222 = vcmp.lt.s32.totalorder %v218, 0
        %vm223 = vmand %vm221, %vm219
        %vm224 = vmand %vm222, %vm220
        %v225 = vadd.s32 %v211, 16
        %v226 = vadd.s32 %v218, 16
        %v227 = vsel %vm223, %v225, %v211
        %v228 = vsel %vm224, %v226, %v218
        %vm229 = vcmp.ge.s32.totalorder %v227, 1
        %vm230 = vcmp.ge.s32.totalorder %v228, 1
        %vm231 = vcmp.le.s32.totalorder %v227, 14
        %vm232 = vcmp.le.s32.totalorder %v228, 14
        %vm233 = vcmask 1048440
        %234 = vst.msk [vmem:[#allocation2] sm:$0xff] %vm233, 0.0
        %235 = vst.msk [vmem:[#allocation2 + $0x20] sm:$0xff] %vm233, 0.0
        %236 = vst.msk [vmem:[#allocation2 + $0x40] sm:$0xff] %vm233, 0.0
        %237 = vst.msk [vmem:[#allocation2 + $0x60] sm:$0xff] %vm233, 0.0
        %vm238 = vcmask 138240
        %239 = vst.msk [vmem:[#allocation2 + $0x18] sm:$0xff] %vm238, 0.0
        %240 = vst.msk [vmem:[#allocation2 + $0x38] sm:$0xff] %vm238, 0.0
        %241 = vst.msk [vmem:[#allocation2 + $0x58] sm:$0xff] %vm238, 0.0
        %242 = vst.msk [vmem:[#allocation2 + $0x78] sm:$0xff] %vm238, 0.0
        %v243 = vld [vmem:[%s175] sm:$0xff]
        %v244 = vld [vmem:[%s175 + $0x8] sm:$0xff]
        %v245 = vld [vmem:[%s175 + $0x10] sm:$0xff]
        %v246 = vld [vmem:[%s175 + $0x18] sm:$0xff]
        %v247 = vld [vmem:[%s175 + $0x20] sm:$0xff]
        %v248 = vld [vmem:[%s175 + $0x28] sm:$0xff]
        %v249 = vld [vmem:[%s175 + $0x30] sm:$0xff]
        %v250 = vld [vmem:[%s175 + $0x38] sm:$0xff]
        %251 = vst [vmem:[#allocation2 + $0x8] sm:$0xff] %v243
        %252 = vst [vmem:[#allocation2 + $0x10] sm:$0xff] %v244
        %253 = vst [vmem:[#allocation2 + $0x28] sm:$0xff] %v245
        %254 = vst [vmem:[#allocation2 + $0x30] sm:$0xff] %v246
        %255 = vst [vmem:[#allocation2 + $0x48] sm:$0xff] %v247
        %256 = vst [vmem:[#allocation2 + $0x50] sm:$0xff] %v248
        %257 = vst [vmem:[#allocation2 + $0x68] sm:$0xff] %v249
        %258 = vst [vmem:[#allocation2 + $0x70] sm:$0xff] %v250
        %v259 = vld [vmem:[#allocation2] sm:$0xff]
        %v260 = vld [vmem:[#allocation2 + $0x8] sm:$0xff]
        %v261 = vld [vmem:[#allocation2 + $0x10] sm:$0xff]
        %v262 = vld [vmem:[#allocation2 + $0x20] sm:$0xff]
        %v263 = vld [vmem:[#allocation2 + $0x28] sm:$0xff]
        %v264 = vld [vmem:[#allocation2 + $0x30] sm:$0xff]
        %v265 = vld [vmem:[#allocation2 + $0x40] sm:$0xff]
        %v266 = vld [vmem:[#allocation2 + $0x48] sm:$0xff]
        %v267 = vld [vmem:[#allocation2 + $0x50] sm:$0xff]
        %v268 = vld [vmem:[#allocation2 + $0x60] sm:$0xff]
        %v269 = vld [vmem:[#allocation2 + $0x68] sm:$0xff]
        %v270 = vld [vmem:[#allocation2 + $0x70] sm:$0xff]
        %283 = vrot.lane.b32.xlu0 %v259, 17
        %v284 = vpop.permute.xlu0 %283
        %285 = vrot.lane.b32.xlu0 %v260, 17
        %v286 = vpop.permute.xlu0 %285
        %287 = vrot.lane.b32.xlu0 %v261, 17
        %v288 = vpop.permute.xlu0 %287
        %289 = vrot.lane.b32.xlu0 %v262, 17
        %v290 = vpop.permute.xlu0 %289
        %291 = vrot.lane.b32.xlu0 %v263, 17
        %v292 = vpop.permute.xlu0 %291
        %293 = vrot.lane.b32.xlu0 %v264, 17
        %v294 = vpop.permute.xlu0 %293
        %295 = vrot.lane.b32.xlu0 %v265, 17
        %v296 = vpop.permute.xlu0 %295
        %297 = vrot.lane.b32.xlu0 %v266, 17
        %v298 = vpop.permute.xlu0 %297
        %299 = vrot.lane.b32.xlu0 %v267, 17
        %v300 = vpop.permute.xlu0 %299
        %301 = vrot.lane.b32.xlu0 %v268, 17
        %v302 = vpop.permute.xlu0 %301
        %303 = vrot.lane.b32.xlu0 %v269, 17
        %v304 = vpop.permute.xlu0 %303
        %305 = vrot.lane.b32.xlu0 %v270, 17
        %v306 = vpop.permute.xlu0 %305
        %v307 = vsel %vm238, %v284, %v286
        %v308 = vsel %vm238, %v286, %v288
        %v309 = vsel %vm238, %v290, %v292
        %v310 = vsel %vm238, %v292, %v294
        %v311 = vsel %vm238, %v296, %v298
        %v312 = vsel %vm238, %v298, %v300
        %v313 = vsel %vm238, %v302, %v304
        %v314 = vsel %vm238, %v304, %v306
        %v323 = vsel %vm229, %v307, 0.0
        %v324 = vsel %vm230, %v308, 0.0
        %v325 = vsel %vm229, %v309, 0.0
        %v326 = vsel %vm230, %v310, 0.0
        %v327 = vsel %vm229, %v311, 0.0
        %v328 = vsel %vm230, %v312, 0.0
        %v329 = vsel %vm229, %v313, 0.0
        %v330 = vsel %vm230, %v314, 0.0
        %331 = vst [vmem:[#allocation3] sm:$0xff] %v323
        %332 = vst [vmem:[#allocation3 + $0x8] sm:$0xff] %v324
        %333 = vst [vmem:[#allocation3 + $0x10] sm:$0xff] %v325
        %334 = vst [vmem:[#allocation3 + $0x18] sm:$0xff] %v326
        %335 = vst [vmem:[#allocation3 + $0x20] sm:$0xff] %v327
        %336 = vst [vmem:[#allocation3 + $0x28] sm:$0xff] %v328
        %337 = vst [vmem:[#allocation3 + $0x30] sm:$0xff] %v329
        %338 = vst [vmem:[#allocation3 + $0x38] sm:$0xff] %v330
        %v339 = vld [vmem:[#allocation2] sm:$0xff]
        %v340 = vld [vmem:[#allocation2 + $0x8] sm:$0xff]
        %v341 = vld [vmem:[#allocation2 + $0x10] sm:$0xff]
        %v342 = vld [vmem:[#allocation2 + $0x20] sm:$0xff]
        %v343 = vld [vmem:[#allocation2 + $0x28] sm:$0xff]
        %v344 = vld [vmem:[#allocation2 + $0x30] sm:$0xff]
        %v345 = vld [vmem:[#allocation2 + $0x40] sm:$0xff]
        %v346 = vld [vmem:[#allocation2 + $0x48] sm:$0xff]
        %v347 = vld [vmem:[#allocation2 + $0x50] sm:$0xff]
        %v348 = vld [vmem:[#allocation2 + $0x60] sm:$0xff]
        %v349 = vld [vmem:[#allocation2 + $0x68] sm:$0xff]
        %v350 = vld [vmem:[#allocation2 + $0x70] sm:$0xff]
        %363 = vrot.lane.b32.xlu0 %v339, 16
        %v364 = vpop.permute.xlu0 %363
        %365 = vrot.lane.b32.xlu0 %v340, 16
        %v366 = vpop.permute.xlu0 %365
        %367 = vrot.lane.b32.xlu0 %v341, 16
        %v368 = vpop.permute.xlu0 %367
        %369 = vrot.lane.b32.xlu0 %v342, 16
        %v370 = vpop.permute.xlu0 %369
        %371 = vrot.lane.b32.xlu0 %v343, 16
        %v372 = vpop.permute.xlu0 %371
        %373 = vrot.lane.b32.xlu0 %v344, 16
        %v374 = vpop.permute.xlu0 %373
        %375 = vrot.lane.b32.xlu0 %v345, 16
        %v376 = vpop.permute.xlu0 %375
        %377 = vrot.lane.b32.xlu0 %v346, 16
        %v378 = vpop.permute.xlu0 %377
        %379 = vrot.lane.b32.xlu0 %v347, 16
        %v380 = vpop.permute.xlu0 %379
        %381 = vrot.lane.b32.xlu0 %v348, 16
        %v382 = vpop.permute.xlu0 %381
        %383 = vrot.lane.b32.xlu0 %v349, 16
        %v384 = vpop.permute.xlu0 %383
        %385 = vrot.lane.b32.xlu0 %v350, 16
        %v386 = vpop.permute.xlu0 %385
        %vm387 = vcmask 130048
        %v388 = vsel %vm387, %v364, %v366
        %v389 = vsel %vm387, %v366, %v368
        %v390 = vsel %vm387, %v370, %v372
        %v391 = vsel %vm387, %v372, %v374
        %v392 = vsel %vm387, %v376, %v378
        %v393 = vsel %vm387, %v378, %v380
        %v394 = vsel %vm387, %v382, %v384
        %v395 = vsel %vm387, %v384, %v386
        %404 = vst [vmem:[#allocation3 + $0x40] sm:$0xff] %v388
        %405 = vst [vmem:[#allocation3 + $0x48] sm:$0xff] %v389
        %406 = vst [vmem:[#allocation3 + $0x50] sm:$0xff] %v390
        %407 = vst [vmem:[#allocation3 + $0x58] sm:$0xff] %v391
        %408 = vst [vmem:[#allocation3 + $0x60] sm:$0xff] %v392
        %409 = vst [vmem:[#allocation3 + $0x68] sm:$0xff] %v393
        %410 = vst [vmem:[#allocation3 + $0x70] sm:$0xff] %v394
        %411 = vst [vmem:[#allocation3 + $0x78] sm:$0xff] %v395
        %v412 = vld [vmem:[#allocation2] sm:$0xff]
        %v413 = vld [vmem:[#allocation2 + $0x8] sm:$0xff]
        %v414 = vld [vmem:[#allocation2 + $0x10] sm:$0xff]
        %v415 = vld [vmem:[#allocation2 + $0x20] sm:$0xff]
        %v416 = vld [vmem:[#allocation2 + $0x28] sm:$0xff]
        %v417 = vld [vmem:[#allocation2 + $0x30] sm:$0xff]
        %v418 = vld [vmem:[#allocation2 + $0x40] sm:$0xff]
        %v419 = vld [vmem:[#allocation2 + $0x48] sm:$0xff]
        %v420 = vld [vmem:[#allocation2 + $0x50] sm:$0xff]
        %v421 = vld [vmem:[#allocation2 + $0x60] sm:$0xff]
        %v422 = vld [vmem:[#allocation2 + $0x68] sm:$0xff]
        %v423 = vld [vmem:[#allocation2 + $0x70] sm:$0xff]
        %436 = vrot.lane.b32.xlu0 %v412, 15
        %v437 = vpop.permute.xlu0 %436
        %438 = vrot.lane.b32.xlu0 %v413, 15
        %v439 = vpop.permute.xlu0 %438
        %440 = vrot.lane.b32.xlu0 %v414, 15
        %v441 = vpop.permute.xlu0 %440
        %442 = vrot.lane.b32.xlu0 %v415, 15
        %v443 = vpop.permute.xlu0 %442
        %444 = vrot.lane.b32.xlu0 %v416, 15
        %v445 = vpop.permute.xlu0 %444
        %446 = vrot.lane.b32.xlu0 %v417, 15
        %v447 = vpop.permute.xlu0 %446
        %448 = vrot.lane.b32.xlu0 %v418, 15
        %v449 = vpop.permute.xlu0 %448
        %450 = vrot.lane.b32.xlu0 %v419, 15
        %v451 = vpop.permute.xlu0 %450
        %452 = vrot.lane.b32.xlu0 %v420, 15
        %v453 = vpop.permute.xlu0 %452
        %454 = vrot.lane.b32.xlu0 %v421, 15
        %v455 = vpop.permute.xlu0 %454
        %456 = vrot.lane.b32.xlu0 %v422, 15
        %v457 = vpop.permute.xlu0 %456
        %458 = vrot.lane.b32.xlu0 %v423, 15
        %v459 = vpop.permute.xlu0 %458
        %vm460 = vcmask 121856
        %v461 = vsel %vm460, %v437, %v439
        %v462 = vsel %vm460, %v439, %v441
        %v463 = vsel %vm460, %v443, %v445
        %v464 = vsel %vm460, %v445, %v447
        %v465 = vsel %vm460, %v449, %v451
        %v466 = vsel %vm460, %v451, %v453
        %v467 = vsel %vm460, %v455, %v457
        %v468 = vsel %vm460, %v457, %v459
        %v477 = vsel %vm231, %v461, 0.0
        %v478 = vsel %vm232, %v462, 0.0
        %v479 = vsel %vm231, %v463, 0.0
        %v480 = vsel %vm232, %v464, 0.0
        %v481 = vsel %vm231, %v465, 0.0
        %v482 = vsel %vm232, %v466, 0.0
        %v483 = vsel %vm231, %v467, 0.0
        %v484 = vsel %vm232, %v468, 0.0
        %485 = vst [vmem:[#allocation3 + $0x80] sm:$0xff] %v477
        %486 = vst [vmem:[#allocation3 + $0x88] sm:$0xff] %v478
        %487 = vst [vmem:[#allocation3 + $0x90] sm:$0xff] %v479
        %488 = vst [vmem:[#allocation3 + $0x98] sm:$0xff] %v480
        %489 = vst [vmem:[#allocation3 + $0xa0] sm:$0xff] %v481
        %490 = vst [vmem:[#allocation3 + $0xa8] sm:$0xff] %v482
        %491 = vst [vmem:[#allocation3 + $0xb0] sm:$0xff] %v483
        %492 = vst [vmem:[#allocation3 + $0xb8] sm:$0xff] %v484
        %v493 = vld [vmem:[#allocation2] sm:$0xff]
        %v494 = vld [vmem:[#allocation2 + $0x8] sm:$0xff]
        %v495 = vld [vmem:[#allocation2 + $0x10] sm:$0xff]
        %v496 = vld [vmem:[#allocation2 + $0x20] sm:$0xff]
        %v497 = vld [vmem:[#allocation2 + $0x28] sm:$0xff]
        %v498 = vld [vmem:[#allocation2 + $0x30] sm:$0xff]
        %v499 = vld [vmem:[#allocation2 + $0x40] sm:$0xff]
        %v500 = vld [vmem:[#allocation2 + $0x48] sm:$0xff]
        %v501 = vld [vmem:[#allocation2 + $0x50] sm:$0xff]
        %v502 = vld [vmem:[#allocation2 + $0x60] sm:$0xff]
        %v503 = vld [vmem:[#allocation2 + $0x68] sm:$0xff]
        %v504 = vld [vmem:[#allocation2 + $0x70] sm:$0xff]
        %517 = vrot.lane.b32.xlu0 %v493, 1
        %v518 = vpop.permute.xlu0 %517
        %519 = vrot.lane.b32.xlu0 %v494, 1
        %v520 = vpop.permute.xlu0 %519
        %521 = vrot.lane.b32.xlu0 %v495, 1
        %v522 = vpop.permute.xlu0 %521
        %523 = vrot.lane.b32.xlu0 %v496, 1
        %v524 = vpop.permute.xlu0 %523
        %525 = vrot.lane.b32.xlu0 %v497, 1
        %v526 = vpop.permute.xlu0 %525
        %527 = vrot.lane.b32.xlu0 %v498, 1
        %v528 = vpop.permute.xlu0 %527
        %529 = vrot.lane.b32.xlu0 %v499, 1
        %v530 = vpop.permute.xlu0 %529
        %531 = vrot.lane.b32.xlu0 %v500, 1
        %v532 = vpop.permute.xlu0 %531
        %533 = vrot.lane.b32.xlu0 %v501, 1
        %v534 = vpop.permute.xlu0 %533
        %535 = vrot.lane.b32.xlu0 %v502, 1
        %v536 = vpop.permute.xlu0 %535
        %537 = vrot.lane.b32.xlu0 %v503, 1
        %v538 = vpop.permute.xlu0 %537
        %539 = vrot.lane.b32.xlu0 %v504, 1
        %v540 = vpop.permute.xlu0 %539
        %vm541 = vcmask 7168
        %v542 = vsel %vm541, %v518, %v520
        %v543 = vsel %vm541, %v520, %v522
        %v544 = vsel %vm541, %v524, %v526
        %v545 = vsel %vm541, %v526, %v528
        %v546 = vsel %vm541, %v530, %v532
        %v547 = vsel %vm541, %v532, %v534
        %v548 = vsel %vm541, %v536, %v538
        %v549 = vsel %vm541, %v538, %v540
        %v558 = vsel %vm229, %v542, 0.0
        %v559 = vsel %vm230, %v543, 0.0
        %v560 = vsel %vm229, %v544, 0.0
        %v561 = vsel %vm230, %v545, 0.0
        %v562 = vsel %vm229, %v546, 0.0
        %v563 = vsel %vm230, %v547, 0.0
        %v564 = vsel %vm229, %v548, 0.0
        %v565 = vsel %vm230, %v549, 0.0
        %566 = vst [vmem:[#allocation3 + $0xc0] sm:$0xff] %v558
        %567 = vst [vmem:[#allocation3 + $0xc8] sm:$0xff] %v559
        %568 = vst [vmem:[#allocation3 + $0xd0] sm:$0xff] %v560
        %569 = vst [vmem:[#allocation3 + $0xd8] sm:$0xff] %v561
        %570 = vst [vmem:[#allocation3 + $0xe0] sm:$0xff] %v562
        %571 = vst [vmem:[#allocation3 + $0xe8] sm:$0xff] %v563
        %572 = vst [vmem:[#allocation3 + $0xf0] sm:$0xff] %v564
        %573 = vst [vmem:[#allocation3 + $0xf8] sm:$0xff] %v565
        %v574 = vld [vmem:[#allocation2 + $0x8] sm:$0xff]
        %v575 = vld [vmem:[#allocation2 + $0x10] sm:$0xff]
        %v576 = vld [vmem:[#allocation2 + $0x28] sm:$0xff]
        %v577 = vld [vmem:[#allocation2 + $0x30] sm:$0xff]
        %v578 = vld [vmem:[#allocation2 + $0x48] sm:$0xff]
        %v579 = vld [vmem:[#allocation2 + $0x50] sm:$0xff]
        %v580 = vld [vmem:[#allocation2 + $0x68] sm:$0xff]
        %v581 = vld [vmem:[#allocation2 + $0x70] sm:$0xff]
        %582 = vst [vmem:[#allocation3 + $0x100] sm:$0xff] %v574
        %583 = vst [vmem:[#allocation3 + $0x108] sm:$0xff] %v575
        %584 = vst [vmem:[#allocation3 + $0x110] sm:$0xff] %v576
        %585 = vst [vmem:[#allocation3 + $0x118] sm:$0xff] %v577
        %586 = vst [vmem:[#allocation3 + $0x120] sm:$0xff] %v578
        %587 = vst [vmem:[#allocation3 + $0x128] sm:$0xff] %v579
        %588 = vst [vmem:[#allocation3 + $0x130] sm:$0xff] %v580
        %589 = vst [vmem:[#allocation3 + $0x138] sm:$0xff] %v581
        %v590 = vld [vmem:[#allocation2 + $0x8] sm:$0xff]
        %v591 = vld [vmem:[#allocation2 + $0x10] sm:$0xff]
        %v592 = vld [vmem:[#allocation2 + $0x18] sm:$0xff]
        %v593 = vld [vmem:[#allocation2 + $0x28] sm:$0xff]
        %v594 = vld [vmem:[#allocation2 + $0x30] sm:$0xff]
        %v595 = vld [vmem:[#allocation2 + $0x38] sm:$0xff]
        %v596 = vld [vmem:[#allocation2 + $0x48] sm:$0xff]
        %v597 = vld [vmem:[#allocation2 + $0x50] sm:$0xff]
        %v598 = vld [vmem:[#allocation2 + $0x58] sm:$0xff]
        %v599 = vld [vmem:[#allocation2 + $0x68] sm:$0xff]
        %v600 = vld [vmem:[#allocation2 + $0x70] sm:$0xff]
        %v601 = vld [vmem:[#allocation2 + $0x78] sm:$0xff]
        %614 = vrot.lane.b32.xlu0 %v590, 127
        %v615 = vpop.permute.xlu0 %614
        %616 = vrot.lane.b32.xlu0 %v591, 127
        %v617 = vpop.permute.xlu0 %616
        %618 = vrot.lane.b32.xlu0 %v592, 127
        %v619 = vpop.permute.xlu0 %618
        %620 = vrot.lane.b32.xlu0 %v593, 127
        %v621 = vpop.permute.xlu0 %620
        %622 = vrot.lane.b32.xlu0 %v594, 127
        %v623 = vpop.permute.xlu0 %622
        %624 = vrot.lane.b32.xlu0 %v595, 127
        %v625 = vpop.permute.xlu0 %624
        %626 = vrot.lane.b32.xlu0 %v596, 127
        %v627 = vpop.permute.xlu0 %626
        %628 = vrot.lane.b32.xlu0 %v597, 127
        %v629 = vpop.permute.xlu0 %628
        %630 = vrot.lane.b32.xlu0 %v598, 127
        %v631 = vpop.permute.xlu0 %630
        %632 = vrot.lane.b32.xlu0 %v599, 127
        %v633 = vpop.permute.xlu0 %632
        %634 = vrot.lane.b32.xlu0 %v600, 127
        %v635 = vpop.permute.xlu0 %634
        %636 = vrot.lane.b32.xlu0 %v601, 127
        %v637 = vpop.permute.xlu0 %636
        %vm638 = vcmask 1039360
        %v639 = vsel %vm638, %v615, %v617
        %v640 = vsel %vm638, %v617, %v619
        %v641 = vsel %vm638, %v621, %v623
        %v642 = vsel %vm638, %v623, %v625
        %v643 = vsel %vm638, %v627, %v629
        %v644 = vsel %vm638, %v629, %v631
        %v645 = vsel %vm638, %v633, %v635
        %v646 = vsel %vm638, %v635, %v637
        %v655 = vsel %vm231, %v639, 0.0
        %v656 = vsel %vm232, %v640, 0.0
        %v657 = vsel %vm231, %v641, 0.0
        %v658 = vsel %vm232, %v642, 0.0
        %v659 = vsel %vm231, %v643, 0.0
        %v660 = vsel %vm232, %v644, 0.0
        %v661 = vsel %vm231, %v645, 0.0
        %v662 = vsel %vm232, %v646, 0.0
        %663 = vst [vmem:[#allocation3 + $0x140] sm:$0xff] %v655
        %664 = vst [vmem:[#allocation3 + $0x148] sm:$0xff] %v656
        %665 = vst [vmem:[#allocation3 + $0x150] sm:$0xff] %v657
        %666 = vst [vmem:[#allocation3 + $0x158] sm:$0xff] %v658
        %667 = vst [vmem:[#allocation3 + $0x160] sm:$0xff] %v659
        %668 = vst [vmem:[#allocation3 + $0x168] sm:$0xff] %v660
        %669 = vst [vmem:[#allocation3 + $0x170] sm:$0xff] %v661
        %670 = vst [vmem:[#allocation3 + $0x178] sm:$0xff] %v662
        %v671 = vld [vmem:[#allocation2 + $0x8] sm:$0xff]
        %v672 = vld [vmem:[#allocation2 + $0x10] sm:$0xff]
        %v673 = vld [vmem:[#allocation2 + $0x18] sm:$0xff]
        %v674 = vld [vmem:[#allocation2 + $0x28] sm:$0xff]
        %v675 = vld [vmem:[#allocation2 + $0x30] sm:$0xff]
        %v676 = vld [vmem:[#allocation2 + $0x38] sm:$0xff]
        %v677 = vld [vmem:[#allocation2 + $0x48] sm:$0xff]
        %v678 = vld [vmem:[#allocation2 + $0x50] sm:$0xff]
        %v679 = vld [vmem:[#allocation2 + $0x58] sm:$0xff]
        %v680 = vld [vmem:[#allocation2 + $0x68] sm:$0xff]
        %v681 = vld [vmem:[#allocation2 + $0x70] sm:$0xff]
        %v682 = vld [vmem:[#allocation2 + $0x78] sm:$0xff]
        %695 = vrot.lane.b32.xlu0 %v671, 113
        %v696 = vpop.permute.xlu0 %695
        %697 = vrot.lane.b32.xlu0 %v672, 113
        %v698 = vpop.permute.xlu0 %697
        %699 = vrot.lane.b32.xlu0 %v673, 113
        %v700 = vpop.permute.xlu0 %699
        %701 = vrot.lane.b32.xlu0 %v674, 113
        %v702 = vpop.permute.xlu0 %701
        %703 = vrot.lane.b32.xlu0 %v675, 113
        %v704 = vpop.permute.xlu0 %703
        %705 = vrot.lane.b32.xlu0 %v676, 113
        %v706 = vpop.permute.xlu0 %705
        %707 = vrot.lane.b32.xlu0 %v677, 113
        %v708 = vpop.permute.xlu0 %707
        %709 = vrot.lane.b32.xlu0 %v678, 113
        %v710 = vpop.permute.xlu0 %709
        %711 = vrot.lane.b32.xlu0 %v679, 113
        %v712 = vpop.permute.xlu0 %711
        %713 = vrot.lane.b32.xlu0 %v680, 113
        %v714 = vpop.permute.xlu0 %713
        %715 = vrot.lane.b32.xlu0 %v681, 113
        %v716 = vpop.permute.xlu0 %715
        %717 = vrot.lane.b32.xlu0 %v682, 113
        %v718 = vpop.permute.xlu0 %717
        %vm719 = vcmask 924672
        %v720 = vsel %vm719, %v696, %v698
        %v721 = vsel %vm719, %v698, %v700
        %v722 = vsel %vm719, %v702, %v704
        %v723 = vsel %vm719, %v704, %v706
        %v724 = vsel %vm719, %v708, %v710
        %v725 = vsel %vm719, %v710, %v712
        %v726 = vsel %vm719, %v714, %v716
        %v727 = vsel %vm719, %v716, %v718
        %v736 = vsel %vm229, %v720, 0.0
        %v737 = vsel %vm230, %v721, 0.0
        %v738 = vsel %vm229, %v722, 0.0
        %v739 = vsel %vm230, %v723, 0.0
        %v740 = vsel %vm229, %v724, 0.0
        %v741 = vsel %vm230, %v725, 0.0
        %v742 = vsel %vm229, %v726, 0.0
        %v743 = vsel %vm230, %v727, 0.0
        %744 = vst [vmem:[#allocation3 + $0x180] sm:$0xff] %v736
        %745 = vst [vmem:[#allocation3 + $0x188] sm:$0xff] %v737
        %746 = vst [vmem:[#allocation3 + $0x190] sm:$0xff] %v738
        %747 = vst [vmem:[#allocation3 + $0x198] sm:$0xff] %v739
        %748 = vst [vmem:[#allocation3 + $0x1a0] sm:$0xff] %v740
        %749 = vst [vmem:[#allocation3 + $0x1a8] sm:$0xff] %v741
        %750 = vst [vmem:[#allocation3 + $0x1b0] sm:$0xff] %v742
        %751 = vst [vmem:[#allocation3 + $0x1b8] sm:$0xff] %v743
        %v752 = vld [vmem:[#allocation2 + $0x8] sm:$0xff]
        %v753 = vld [vmem:[#allocation2 + $0x10] sm:$0xff]
        %v754 = vld [vmem:[#allocation2 + $0x18] sm:$0xff]
        %v755 = vld [vmem:[#allocation2 + $0x28] sm:$0xff]
        %v756 = vld [vmem:[#allocation2 + $0x30] sm:$0xff]
        %v757 = vld [vmem:[#allocation2 + $0x38] sm:$0xff]
        %v758 = vld [vmem:[#allocation2 + $0x48] sm:$0xff]
        %v759 = vld [vmem:[#allocation2 + $0x50] sm:$0xff]
        %v760 = vld [vmem:[#allocation2 + $0x58] sm:$0xff]
        %v761 = vld [vmem:[#allocation2 + $0x68] sm:$0xff]
        %v762 = vld [vmem:[#allocation2 + $0x70] sm:$0xff]
        %v763 = vld [vmem:[#allocation2 + $0x78] sm:$0xff]
        %776 = vrot.lane.b32.xlu0 %v752, 112
        %v777 = vpop.permute.xlu0 %776
        %778 = vrot.lane.b32.xlu0 %v753, 112
        %v779 = vpop.permute.xlu0 %778
        %780 = vrot.lane.b32.xlu0 %v754, 112
        %v781 = vpop.permute.xlu0 %780
        %782 = vrot.lane.b32.xlu0 %v755, 112
        %v783 = vpop.permute.xlu0 %782
        %784 = vrot.lane.b32.xlu0 %v756, 112
        %v785 = vpop.permute.xlu0 %784
        %786 = vrot.lane.b32.xlu0 %v757, 112
        %v787 = vpop.permute.xlu0 %786
        %788 = vrot.lane.b32.xlu0 %v758, 112
        %v789 = vpop.permute.xlu0 %788
        %790 = vrot.lane.b32.xlu0 %v759, 112
        %v791 = vpop.permute.xlu0 %790
        %792 = vrot.lane.b32.xlu0 %v760, 112
        %v793 = vpop.permute.xlu0 %792
        %794 = vrot.lane.b32.xlu0 %v761, 112
        %v795 = vpop.permute.xlu0 %794
        %796 = vrot.lane.b32.xlu0 %v762, 112
        %v797 = vpop.permute.xlu0 %796
        %798 = vrot.lane.b32.xlu0 %v763, 112
        %v799 = vpop.permute.xlu0 %798
        %vm800 = vcmask 916480
        %v801 = vsel %vm800, %v777, %v779
        %v802 = vsel %vm800, %v779, %v781
        %v803 = vsel %vm800, %v783, %v785
        %v804 = vsel %vm800, %v785, %v787
        %v805 = vsel %vm800, %v789, %v791
        %v806 = vsel %vm800, %v791, %v793
        %v807 = vsel %vm800, %v795, %v797
        %v808 = vsel %vm800, %v797, %v799
        %817 = vst [vmem:[#allocation3 + $0x1c0] sm:$0xff] %v801
        %818 = vst [vmem:[#allocation3 + $0x1c8] sm:$0xff] %v802
        %819 = vst [vmem:[#allocation3 + $0x1d0] sm:$0xff] %v803
        %820 = vst [vmem:[#allocation3 + $0x1d8] sm:$0xff] %v804
        %821 = vst [vmem:[#allocation3 + $0x1e0] sm:$0xff] %v805
        %822 = vst [vmem:[#allocation3 + $0x1e8] sm:$0xff] %v806
        %823 = vst [vmem:[#allocation3 + $0x1f0] sm:$0xff] %v807
        %824 = vst [vmem:[#allocation3 + $0x1f8] sm:$0xff] %v808
        %v825 = vld [vmem:[#allocation2 + $0x8] sm:$0xff]
        %v826 = vld [vmem:[#allocation2 + $0x10] sm:$0xff]
        %v827 = vld [vmem:[#allocation2 + $0x18] sm:$0xff]
        %v828 = vld [vmem:[#allocation2 + $0x28] sm:$0xff]
        %v829 = vld [vmem:[#allocation2 + $0x30] sm:$0xff]
        %v830 = vld [vmem:[#allocation2 + $0x38] sm:$0xff]
        %v831 = vld [vmem:[#allocation2 + $0x48] sm:$0xff]
        %v832 = vld [vmem:[#allocation2 + $0x50] sm:$0xff]
        %v833 = vld [vmem:[#allocation2 + $0x58] sm:$0xff]
        %v834 = vld [vmem:[#allocation2 + $0x68] sm:$0xff]
        %v835 = vld [vmem:[#allocation2 + $0x70] sm:$0xff]
        %v836 = vld [vmem:[#allocation2 + $0x78] sm:$0xff]
        %849 = vrot.lane.b32.xlu0 %v825, 111
        %v850 = vpop.permute.xlu0 %849
        %851 = vrot.lane.b32.xlu0 %v826, 111
        %v852 = vpop.permute.xlu0 %851
        %853 = vrot.lane.b32.xlu0 %v827, 111
        %v854 = vpop.permute.xlu0 %853
        %855 = vrot.lane.b32.xlu0 %v828, 111
        %v856 = vpop.permute.xlu0 %855
        %857 = vrot.lane.b32.xlu0 %v829, 111
        %v858 = vpop.permute.xlu0 %857
        %859 = vrot.lane.b32.xlu0 %v830, 111
        %v860 = vpop.permute.xlu0 %859
        %861 = vrot.lane.b32.xlu0 %v831, 111
        %v862 = vpop.permute.xlu0 %861
        %863 = vrot.lane.b32.xlu0 %v832, 111
        %v864 = vpop.permute.xlu0 %863
        %865 = vrot.lane.b32.xlu0 %v833, 111
        %v866 = vpop.permute.xlu0 %865
        %867 = vrot.lane.b32.xlu0 %v834, 111
        %v868 = vpop.permute.xlu0 %867
        %869 = vrot.lane.b32.xlu0 %v835, 111
        %v870 = vpop.permute.xlu0 %869
        %871 = vrot.lane.b32.xlu0 %v836, 111
        %v872 = vpop.permute.xlu0 %871
        %vm873 = vcmask 908288
        %v874 = vsel %vm873, %v850, %v852
        %v875 = vsel %vm873, %v852, %v854
        %v876 = vsel %vm873, %v856, %v858
        %v877 = vsel %vm873, %v858, %v860
        %v878 = vsel %vm873, %v862, %v864
        %v879 = vsel %vm873, %v864, %v866
        %v880 = vsel %vm873, %v868, %v870
        %v881 = vsel %vm873, %v870, %v872
        %v890 = vsel %vm231, %v874, 0.0
        %v891 = vsel %vm232, %v875, 0.0
        %v892 = vsel %vm231, %v876, 0.0
        %v893 = vsel %vm232, %v877, 0.0
        %v894 = vsel %vm231, %v878, 0.0
        %v895 = vsel %vm232, %v879, 0.0
        %v896 = vsel %vm231, %v880, 0.0
        %v897 = vsel %vm232, %v881, 0.0
        %898 = vst [vmem:[#allocation3 + $0x200] sm:$0xff] %v890
        %899 = vst [vmem:[#allocation3 + $0x208] sm:$0xff] %v891
        %900 = vst [vmem:[#allocation3 + $0x210] sm:$0xff] %v892
        %901 = vst [vmem:[#allocation3 + $0x218] sm:$0xff] %v893
        %902 = vst [vmem:[#allocation3 + $0x220] sm:$0xff] %v894
        %903 = vst [vmem:[#allocation3 + $0x228] sm:$0xff] %v895
        %904 = vst [vmem:[#allocation3 + $0x230] sm:$0xff] %v896
        %905 = vst [vmem:[#allocation3 + $0x238] sm:$0xff] %v897
        %v906 = vld [vmem:[%s2] sm:$0xf]
        %v907 = vld [vmem:[#allocation7] sm:$0xff]
        %v908 = vld [vmem:[#allocation7 + $0x8] sm:$0xf]
        %v909 = vld [vmem:[#allocation3] sm:$0xff]
        %v910 = vld [vmem:[#allocation3 + $0x8] sm:$0xff]
        %v911 = vld [vmem:[#allocation3 + $0x10] sm:$0xff]
        %v912 = vld [vmem:[#allocation3 + $0x18] sm:$0xff]
        %v913 = vld [vmem:[#allocation3 + $0x20] sm:$0xff]
        %v914 = vld [vmem:[#allocation3 + $0x28] sm:$0xff]
        %v915 = vld [vmem:[#allocation3 + $0x30] sm:$0xff]
        %v916 = vld [vmem:[#allocation3 + $0x38] sm:$0xff]
        %v917 = vld [vmem:[#allocation3 + $0x40] sm:$0xff]
        %v918 = vld [vmem:[#allocation3 + $0x48] sm:$0xff]
        %v919 = vld [vmem:[#allocation3 + $0x50] sm:$0xff]
        %v920 = vld [vmem:[#allocation3 + $0x58] sm:$0xff]
        %v921 = vld [vmem:[#allocation3 + $0x60] sm:$0xff]
        %v922 = vld [vmem:[#allocation3 + $0x68] sm:$0xff]
        %v923 = vld [vmem:[#allocation3 + $0x70] sm:$0xff]
        %v924 = vld [vmem:[#allocation3 + $0x78] sm:$0xff]
        %v925 = vld [vmem:[#allocation3 + $0x80] sm:$0xff]
        %v926 = vld [vmem:[#allocation3 + $0x88] sm:$0xff]
        %v927 = vld [vmem:[#allocation3 + $0x90] sm:$0xff]
        %v928 = vld [vmem:[#allocation3 + $0x98] sm:$0xff]
        %v929 = vld [vmem:[#allocation3 + $0xa0] sm:$0xff]
        %v930 = vld [vmem:[#allocation3 + $0xa8] sm:$0xff]
        %v931 = vld [vmem:[#allocation3 + $0xb0] sm:$0xff]
        %v932 = vld [vmem:[#allocation3 + $0xb8] sm:$0xff]
        %v933 = vld [vmem:[#allocation3 + $0xc0] sm:$0xff]
        %v934 = vld [vmem:[#allocation3 + $0xc8] sm:$0xff]
        %v935 = vld [vmem:[#allocation3 + $0xd0] sm:$0xff]
        %v936 = vld [vmem:[#allocation3 + $0xd8] sm:$0xff]
        %v937 = vld [vmem:[#allocation3 + $0xe0] sm:$0xff]
        %v938 = vld [vmem:[#allocation3 + $0xe8] sm:$0xff]
        %v939 = vld [vmem:[#allocation3 + $0xf0] sm:$0xff]
        %v940 = vld [vmem:[#allocation3 + $0xf8] sm:$0xff]
        %v941 = vld [vmem:[#allocation3 + $0x100] sm:$0xff]
        %v942 = vld [vmem:[#allocation3 + $0x108] sm:$0xff]
        %v943 = vld [vmem:[#allocation3 + $0x110] sm:$0xff]
        %v944 = vld [vmem:[#allocation3 + $0x118] sm:$0xff]
        %v945 = vld [vmem:[#allocation3 + $0x120] sm:$0xff]
        %v946 = vld [vmem:[#allocation3 + $0x128] sm:$0xff]
        %v947 = vld [vmem:[#allocation3 + $0x130] sm:$0xff]
        %v948 = vld [vmem:[#allocation3 + $0x138] sm:$0xff]
        %v949 = vld [vmem:[#allocation3 + $0x140] sm:$0xff]
        %v950 = vld [vmem:[#allocation3 + $0x148] sm:$0xff]
        %v951 = vld [vmem:[#allocation3 + $0x150] sm:$0xff]
        %v952 = vld [vmem:[#allocation3 + $0x158] sm:$0xff]
        %v953 = vld [vmem:[#allocation3 + $0x160] sm:$0xff]
        %v954 = vld [vmem:[#allocation3 + $0x168] sm:$0xff]
        %v955 = vld [vmem:[#allocation3 + $0x170] sm:$0xff]
        %v956 = vld [vmem:[#allocation3 + $0x178] sm:$0xff]
        %v957 = vld [vmem:[#allocation3 + $0x180] sm:$0xff]
        %v958 = vld [vmem:[#allocation3 + $0x188] sm:$0xff]
        %v959 = vld [vmem:[#allocation3 + $0x190] sm:$0xff]
        %v960 = vld [vmem:[#allocation3 + $0x198] sm:$0xff]
        %v961 = vld [vmem:[#allocation3 + $0x1a0] sm:$0xff]
        %v962 = vld [vmem:[#allocation3 + $0x1a8] sm:$0xff]
        %v963 = vld [vmem:[#allocation3 + $0x1b0] sm:$0xff]
        %v964 = vld [vmem:[#allocation3 + $0x1b8] sm:$0xff]
        %v965 = vld [vmem:[#allocation3 + $0x1c0] sm:$0xff]
        %v966 = vld [vmem:[#allocation3 + $0x1c8] sm:$0xff]
        %v967 = vld [vmem:[#allocation3 + $0x1d0] sm:$0xff]
        %v968 = vld [vmem:[#allocation3 + $0x1d8] sm:$0xff]
        %v969 = vld [vmem:[#allocation3 + $0x1e0] sm:$0xff]
        %v970 = vld [vmem:[#allocation3 + $0x1e8] sm:$0xff]
        %v971 = vld [vmem:[#allocation3 + $0x1f0] sm:$0xff]
        %v972 = vld [vmem:[#allocation3 + $0x1f8] sm:$0xff]
        %v973 = vld [vmem:[#allocation3 + $0x200] sm:$0xff]
        %v974 = vld [vmem:[#allocation3 + $0x208] sm:$0xff]
        %v975 = vld [vmem:[#allocation3 + $0x210] sm:$0xff]
        %v976 = vld [vmem:[#allocation3 + $0x218] sm:$0xff]
        %v977 = vld [vmem:[#allocation3 + $0x220] sm:$0xff]
        %v978 = vld [vmem:[#allocation3 + $0x228] sm:$0xff]
        %v979 = vld [vmem:[#allocation3 + $0x230] sm:$0xff]
        %v980 = vld [vmem:[#allocation3 + $0x238] sm:$0xff]
        %982 = vset.pattern.permute.xlu0 8
        %983 = vperm.xlu0 %982, %v906
        %v984 = vpop.permute.xlu0 %983
        %v988 = vcombine.high %v907, %v907
        %vm990 = vcmask 261120
        %v991 = vsel %vm990, %v908, 0
        %993 = vmatprep.subr.mxu0 %v910
        %994 = vmatpush1.msra.mxu0 %v909
        %995 = vmatprep.subr.mxu0 %v912
        %996 = vmatpush1.msra.mxu0 %v911
        %997 = vmatprep.subr.mxu0 %v914
        %998 = vmatpush1.msra.mxu0 %v913
        %999 = vmatprep.subr.mxu0 %v916
        %1000 = vmatpush1.msra.mxu0 %v915
        %1001 = vmatprep.subr.mxu0 %v918
        %1002 = vmatpush1.msra.mxu0 %v917
        %1003 = vmatprep.subr.mxu0 %v920
        %1004 = vmatpush1.msra.mxu0 %v919
        %1005 = vmatprep.subr.mxu0 %v922
        %1006 = vmatpush1.msra.mxu0 %v921
        %1007 = vmatprep.subr.mxu0 %v924
        %1008 = vmatpush1.msra.mxu0 %v923
        %1009 = vmatprep.subr.mxu0 %v926
        %1010 = vmatpush1.msra.mxu0 %v925
        %1011 = vmatprep.subr.mxu0 %v928
        %1012 = vmatpush1.msra.mxu0 %v927
        %1013 = vmatprep.subr.mxu0 %v930
        %1014 = vmatpush1.msra.mxu0 %v929
        %1015 = vmatprep.subr.mxu0 %v932
        %1016 = vmatpush1.msra.mxu0 %v931
        %1017 = vmatprep.subr.mxu0 %v934
        %1018 = vmatpush1.msra.mxu0 %v933
        %1019 = vmatprep.subr.mxu0 %v936
        %1020 = vmatpush1.msra.mxu0 %v935
        %1021 = vmatprep.subr.mxu0 %v938
        %1022 = vmatpush1.msra.mxu0 %v937
        %1023 = vmatprep.subr.mxu0 %v940
        %1024 = vmatpush1.msra.mxu0 %v939
        %1025 = vmatprep.subr.mxu0 %v942
        %1026 = vmatpush1.msra.mxu0 %v941
        %1027 = vmatprep.subr.mxu0 %v944
        %1028 = vmatpush1.msra.mxu0 %v943
        %1029 = vmatprep.subr.mxu0 %v946
        %1030 = vmatpush1.msra.mxu0 %v945
        %1031 = vmatprep.subr.mxu0 %v948
        %1032 = vmatpush1.msra.mxu0 %v947
        %1033 = vmatprep.subr.mxu0 %v950
        %1034 = vmatpush1.msra.mxu0 %v949
        %1035 = vmatprep.subr.mxu0 %v952
        %1036 = vmatpush1.msra.mxu0 %v951
        %1037 = vmatprep.subr.mxu0 %v954
        %1038 = vmatpush1.msra.mxu0 %v953
        %1039 = vmatprep.subr.mxu0 %v956
        %1040 = vmatpush1.msra.mxu0 %v955
        %1041 = vmatprep.subr.mxu0 %v958
        %1042 = vmatpush1.msra.mxu0 %v957
        %1043 = vmatprep.subr.mxu0 %v960
        %1044 = vmatpush1.msra.mxu0 %v959
        %1045 = vmatprep.subr.mxu0 %v962
        %1046 = vmatpush1.msra.mxu0 %v961
        %1047 = vmatprep.subr.mxu0 %v964
        %1048 = vmatpush1.msra.mxu0 %v963
        %1049 = vmatprep.subr.mxu0 %v966
        %1050 = vmatpush1.msra.mxu0 %v965
        %1051 = vmatprep.subr.mxu0 %v968
        %1052 = vmatpush1.msra.mxu0 %v967
        %1053 = vmatprep.subr.mxu0 %v970
        %1054 = vmatpush1.msra.mxu0 %v969
        %1055 = vmatprep.subr.mxu0 %v972
        %1056 = vmatpush1.msra.mxu0 %v971
        %1057 = vmatprep.mubr.f32.mxu0 %v988
        %1058 = vmatmul.mubr.f32.gmra.mrb[0].mxu0 %v907
        %v1059 = vpop.f32.mrb[0].mxu0
        %v1060 = vadd.f32 %v984, %v1059
        %v1061 = vpop.f32.mrb[0].mxu0
        %v1062 = vadd.f32 %v984, %v1061
        %1063 = vdwg.mxu0
        %1064 = vmatprep.subr.mxu0 %v974
        %1065 = vmatpush1.msra.mxu0 %v973
        %1066 = vmatprep.subr.mxu0 %v976
        %1067 = vmatpush1.msra.mxu0 %v975
        %1068 = vmatprep.subr.mxu0 %v978
        %1069 = vmatpush1.msra.mxu0 %v977
        %1070 = vmatprep.subr.mxu0 %v980
        %1071 = vmatpush1.msra.mxu0 %v979
        %1072 = vmatprep.subr.mxu0 0.0
        %1073 = vmatpush1.msra.mxu0 0.0
        %1074 = vmatprep.subr.mxu0 0.0
        %1075 = vmatpush1.msra.mxu0 0.0
        %1076 = vmatprep.subr.mxu0 0.0
        %1077 = vmatpush1.msra.mxu0 0.0
        %1078 = vmatprep.subr.mxu0 0.0
        %1079 = vmatpush1.msra.mxu0 0.0
        %1080 = vmatprep.subr.mxu0 0.0
        %1081 = vmatpush1.msra.mxu0 0.0
        %1082 = vmatprep.subr.mxu0 0.0
        %1083 = vmatpush1.msra.mxu0 0.0
        %1084 = vmatprep.subr.mxu0 0.0
        %1085 = vmatpush1.msra.mxu0 0.0
        %1086 = vmatprep.subr.mxu0 0.0
        %1087 = vmatpush1.msra.mxu0 0.0
        %1088 = vmatprep.subr.mxu0 0.0
        %1089 = vmatpush1.msra.mxu0 0.0
        %1090 = vmatprep.subr.mxu0 0.0
        %1091 = vmatpush1.msra.mxu0 0.0
        %1092 = vmatprep.subr.mxu0 0.0
        %1093 = vmatpush1.msra.mxu0 0.0
        %1094 = vmatprep.subr.mxu0 0.0
        %1095 = vmatpush1.msra.mxu0 0.0
        %1096 = vmatprep.subr.mxu0 0.0
        %1097 = vmatpush1.msra.mxu0 0.0
        %1098 = vmatprep.subr.mxu0 0.0
        %1099 = vmatpush1.msra.mxu0 0.0
        %1100 = vmatprep.subr.mxu0 0.0
        %1101 = vmatpush1.msra.mxu0 0.0
        %1102 = vmatprep.subr.mxu0 0.0
        %1103 = vmatpush1.msra.mxu0 0.0
        %1104 = vmatprep.subr.mxu0 0.0
        %1105 = vmatpush1.msra.mxu0 0.0
        %1106 = vmatprep.subr.mxu0 0.0
        %1107 = vmatpush1.msra.mxu0 0.0
        %1108 = vmatprep.subr.mxu0 0.0
        %1109 = vmatpush1.msra.mxu0 0.0
        %1110 = vmatprep.subr.mxu0 0.0
        %1111 = vmatpush1.msra.mxu0 0.0
        %1112 = vmatprep.subr.mxu0 0.0
        %1113 = vmatpush1.msra.mxu0 0.0
        %1114 = vmatprep.subr.mxu0 0.0
        %1115 = vmatpush1.msra.mxu0 0.0
        %1116 = vmatprep.subr.mxu0 0.0
        %1117 = vmatpush1.msra.mxu0 0.0
        %1118 = vmatprep.subr.mxu0 0.0
        %1119 = vmatpush1.msra.mxu0 0.0
        %1120 = vmatprep.subr.mxu0 0.0
        %1121 = vmatpush1.msra.mxu0 0.0
        %1122 = vmatprep.subr.mxu0 0.0
        %1123 = vmatpush1.msra.mxu0 0.0
        %1124 = vmatprep.subr.mxu0 0.0
        %1125 = vmatpush1.msra.mxu0 0.0
        %1126 = vmatprep.subr.mxu0 0.0
        %1127 = vmatpush1.msra.mxu0 0.0
        %1128 = vmatprep.mubr.f32.mxu0 0.0
        %1129 = vmatmul.mubr.f32.gmra.mrb[0].mxu0 %v991
        %v1130 = vpop.f32.mrb[0].mxu0
        %v1131 = vadd.f32 %v1060, %v1130
        %v1132 = vpop.f32.mrb[0].mxu0
        %v1133 = vadd.f32 %v1062, %v1132
        %1134 = vdwg.mxu0
        %v1135 = vmax.f32 %v1131, 0.0
        %v1136 = vmax.f32 %v1133, 0.0
        %v1137 = vld [vmem:[%s2] sm:$0xf]
        %1139 = vset.pattern.permute.xlu0 9
        %1140 = vperm.xlu0 %1139, %v1137
        %v1141 = vpop.permute.xlu0 %1140
        %v1143 = vadd.f32 %v1141, 0.0
        %1144 = vset.pattern.permute.xlu0 0
        %1145 = vperm.xlu0 %1144, %v1137
        %v1146 = vpop.permute.xlu0 %1145
        %v1148 = vlaneseq
        %v1149 = vshrl.u32 %v1148, 7
        %v1150 = vsub.s32 0, %v1149
        %v1151 = vrot.slane %v1135, %v1150
        %v1152 = vlaneseq
        %v1153 = vshrl.u32 %v1152, 7
        %v1154 = vsub.s32 0, %v1153
        %v1155 = vrot.slane %v1136, %v1154
        %v1156 = vmul.f32 %v1146, %v1151
        %v1157 = vmul.f32 %v1146, %v1155
        %v1158 = vadd.f32 %v1143, %v1156
        %v1159 = vadd.f32 %v1143, %v1157
        %1160 = vset.pattern.permute.xlu0 1
        %1161 = vperm.xlu0 %1160, %v1137
        %v1162 = vpop.permute.xlu0 %1161
        %v1164 = vlaneseq
        %v1165 = vshrl.u32 %v1164, 7
        %v1166 = vsub.s32 1, %v1165
        %v1167 = vrot.slane %v1135, %v1166
        %v1168 = vlaneseq
        %v1169 = vshrl.u32 %v1168, 7
        %v1170 = vsub.s32 1, %v1169
        %v1171 = vrot.slane %v1136, %v1170
        %v1172 = vmul.f32 %v1162, %v1167
        %v1173 = vmul.f32 %v1162, %v1171
        %v1174 = vadd.f32 %v1158, %v1172
        %v1175 = vadd.f32 %v1159, %v1173
        %1176 = vset.pattern.permute.xlu0 2
        %1177 = vperm.xlu0 %1176, %v1137
        %v1178 = vpop.permute.xlu0 %1177
        %v1180 = vlaneseq
        %v1181 = vshrl.u32 %v1180, 7
        %v1182 = vsub.s32 2, %v1181
        %v1183 = vrot.slane %v1135, %v1182
        %v1184 = vlaneseq
        %v1185 = vshrl.u32 %v1184, 7
        %v1186 = vsub.s32 2, %v1185
        %v1187 = vrot.slane %v1136, %v1186
        %v1188 = vmul.f32 %v1178, %v1183
        %v1189 = vmul.f32 %v1178, %v1187
        %v1190 = vadd.f32 %v1174, %v1188
        %v1191 = vadd.f32 %v1175, %v1189
        %1192 = vset.pattern.permute.xlu0 3
        %1193 = vperm.xlu0 %1192, %v1137
        %v1194 = vpop.permute.xlu0 %1193
        %v1196 = vlaneseq
        %v1197 = vshrl.u32 %v1196, 7
        %v1198 = vsub.s32 3, %v1197
        %v1199 = vrot.slane %v1135, %v1198
        %v1200 = vlaneseq
        %v1201 = vshrl.u32 %v1200, 7
        %v1202 = vsub.s32 3, %v1201
        %v1203 = vrot.slane %v1136, %v1202
        %v1204 = vmul.f32 %v1194, %v1199
        %v1205 = vmul.f32 %v1194, %v1203
        %v1206 = vadd.f32 %v1190, %v1204
        %v1207 = vadd.f32 %v1191, %v1205
        %v1208 = vmax.f32 %v1206, 0.0
        %v1209 = vmax.f32 %v1207, 0.0
        %1210 = vset.pattern.permute.xlu0 10
        %1211 = vperm.xlu0 %1210, %v1137
        %v1212 = vpop.permute.xlu0 %1211
        %v1214 = vadd.f32 %v1212, 0.0
        %1215 = vset.pattern.permute.xlu0 4
        %1216 = vperm.xlu0 %1215, %v1137
        %v1217 = vpop.permute.xlu0 %1216
        %v1219 = vlaneseq
        %v1220 = vshrl.u32 %v1219, 7
        %v1221 = vsub.s32 0, %v1220
        %v1222 = vrot.slane %v1208, %v1221
        %v1223 = vlaneseq
        %v1224 = vshrl.u32 %v1223, 7
        %v1225 = vsub.s32 0, %v1224
        %v1226 = vrot.slane %v1209, %v1225
        %v1227 = vmul.f32 %v1217, %v1222
        %v1228 = vmul.f32 %v1217, %v1226
        %v1229 = vadd.f32 %v1214, %v1227
        %v1230 = vadd.f32 %v1214, %v1228
        %1231 = vset.pattern.permute.xlu0 5
        %1232 = vperm.xlu0 %1231, %v1137
        %v1233 = vpop.permute.xlu0 %1232
        %v1235 = vlaneseq
        %v1236 = vshrl.u32 %v1235, 7
        %v1237 = vsub.s32 1, %v1236
        %v1238 = vrot.slane %v1208, %v1237
        %v1239 = vlaneseq
        %v1240 = vshrl.u32 %v1239, 7
        %v1241 = vsub.s32 1, %v1240
        %v1242 = vrot.slane %v1209, %v1241
        %v1243 = vmul.f32 %v1233, %v1238
        %v1244 = vmul.f32 %v1233, %v1242
        %v1245 = vadd.f32 %v1229, %v1243
        %v1246 = vadd.f32 %v1230, %v1244
        %1247 = vset.pattern.permute.xlu0 6
        %1248 = vperm.xlu0 %1247, %v1137
        %v1249 = vpop.permute.xlu0 %1248
        %v1251 = vlaneseq
        %v1252 = vshrl.u32 %v1251, 7
        %v1253 = vsub.s32 2, %v1252
        %v1254 = vrot.slane %v1208, %v1253
        %v1255 = vlaneseq
        %v1256 = vshrl.u32 %v1255, 7
        %v1257 = vsub.s32 2, %v1256
        %v1258 = vrot.slane %v1209, %v1257
        %v1259 = vmul.f32 %v1249, %v1254
        %v1260 = vmul.f32 %v1249, %v1258
        %v1261 = vadd.f32 %v1245, %v1259
        %v1262 = vadd.f32 %v1246, %v1260
        %1263 = vset.pattern.permute.xlu0 7
        %1264 = vperm.xlu0 %1263, %v1137
        %v1265 = vpop.permute.xlu0 %1264
        %v1267 = vlaneseq
        %v1268 = vshrl.u32 %v1267, 7
        %v1269 = vsub.s32 3, %v1268
        %v1270 = vrot.slane %v1208, %v1269
        %v1271 = vlaneseq
        %v1272 = vshrl.u32 %v1271, 7
        %v1273 = vsub.s32 3, %v1272
        %v1274 = vrot.slane %v1209, %v1273
        %v1275 = vmul.f32 %v1265, %v1270
        %v1276 = vmul.f32 %v1265, %v1274
        %v1277 = vadd.f32 %v1261, %v1275
        %v1278 = vadd.f32 %v1262, %v1276
        %v1279 = vadd.f32 %v1277, %v1135
        %v1280 = vadd.f32 %v1278, %v1136
        %v1281 = vmax.f32 %v1279, 0.0
        %v1282 = vmax.f32 %v1280, 0.0
        %v1283 = vld [vmem:[%s2] sm:$0x1]
        %1284 = vset.pattern.permute.xlu0 11
        %1285 = vperm.xlu0 %1284, %v1137
        %v1286 = vpop.permute.xlu0 %1285
        %v1288 = vmul.f32 %v1281, %v1286
        %v1289 = vmul.f32 %v1282, %v1286
        %vm1290 = vcmask 1043456
        %v1291 = vsel %vm1290, %v1288, 0.0
        %v1292 = vrot.slane %v1291, 4
        %v1293 = vadd.f32 %v1291, %v1292
        %v1294 = vrot.slane %v1293, 2
        %v1295 = vadd.f32 %v1293, %v1294
        %v1296 = vrot.slane %v1295, 1
        %v1297 = vadd.f32 %v1295, %v1296
        %v1298 = vsel %vm1290, %v1289, 0.0
        %v1299 = vrot.slane %v1298, 4
        %v1300 = vadd.f32 %v1298, %v1299
        %v1301 = vrot.slane %v1300, 2
        %v1302 = vadd.f32 %v1300, %v1301
        %v1303 = vrot.slane %v1302, 1
        %v1304 = vadd.f32 %v1302, %v1303
        %1306 = vset.pattern.permute.xlu0 12
        %1307 = vperm.xlu0 %1306, %v1283
        %v1308 = vpop.permute.xlu0 %1307
        %v1310 = vadd.f32 %v1297, %v1308
        %v1311 = vadd.f32 %v1304, %v1308
        %v1312 = vsub.f32 0.0, %v1310
        %v1313 = vsub.f32 0.0, %v1311
        %v1314 = vmul.f32 %v1312, 1.442695
        %v1315 = vpow.pop %v1314
        %v1316 = vmul.f32 %v1313, 1.442695
        %v1317 = vpow.pop %v1316
        %v1318 = vadd.f32 %v1315, 1.0
        %v1319 = vadd.f32 %v1317, 1.0
        %v1320 = vrcp.pop %v1318
        %v1321 = vmul.f32 1.0, %v1320
        %v1322 = vrcp.pop %v1319
        %v1323 = vmul.f32 1.0, %v1322
        %v1326 = vcombine.low %v1321, %v1323
        %v1328 = vunpack.c.l.s4 1966171168
        %v1329 = vunpack.c.0.s8 %v1328
        %v1330 = vlaneseq
        %v1331 = vshrl.u32 %v1330, 7
        %v1332 = vsub.s32 %v1329, %v1331
        %v1333 = vrot.slane %v1326, %v1332
        %v1335 = vunpack.c.l.s4 1966171168
        %v1336 = vunpack.c.0.s8 %v1335
        %v1337 = vlaneseq
        %v1338 = vshrl.u32 %v1337, 7
        %v1339 = vsub.s32 %v1336, %v1338
        %v1340 = vrot.slane %v1333, %v1339
        %v1342 = vlaneseq
        %vm1343 = vcmp.ge.s32.totalorder %v1342, 0
        %vm1344 = vcmp.lt.s32.totalorder %v1342, 256
        %vm1345 = vmand %vm1343, %vm1344
        %1346 = vst.msk [vmem:[%s201] sm:$0x3] %vm1345, %v1340
        %s1347 = sand.u32 %s97, 1
        %s1348 = scalar_lea.sflag [#allocation6], %s1347
        %s1349 = sand.u32 %s97, 1
        %s1350 = smul.addr %s1349, 2
        %s1351 = scalar_lea.vmem [#allocation9], %s1350
        // Predicated region
        $region41: #{tpu_custom_call.1} parent=31 // pred_check
          %p1352 = pneg %p107
        $region42: #{tpu_custom_call.1} parent=31 // pred_check_branch
          %1354 = sbr.rel (%p1352) target = $region44
        $region43: #{tpu_custom_call.1} parent=31 // pred_region
          %s1356 = ssub.s32 32, 32
          %1357 = vsyncadd %s1348, %s1356
          %s1358 = smul.addr %s21, 2
          %s1359 = smul.addr %s1358, 16
          %s1360 = scalar_lea.hbm %s3, %s1359
          %s1362 = sshll.u32 %s1351, 4
          %s1363 = int_to_ptr.vmem [resolvable:$true] %s1362
          %1365 = dma.vmem_to_hbm [thread:$0]  %s1363, 32, %s1360, %s1348
        $region44: #{tpu_custom_call.1} parent=31 // pred_fallthru
          _
      $region32: #{tpu_custom_call.1} parent=5 // pred_fallthru
        _
      %p1366 = scmp.le.s32.totalorder 2, %s16
      // Predicated region
      $region45: #{tpu_custom_call.1} parent=5 // pred_check
        %p1367 = pneg %p1366
      $region46: #{tpu_custom_call.1} parent=5 // pred_check_branch
        %1369 = sbr.rel (%p1367) target = $region48
      $region47: #{tpu_custom_call.1} parent=5 // pred_region
        %s1370 = ssub.s32 %s16, 2
        // Predicated region
        $region49: #{tpu_custom_call.1} parent=47 // pred_check
          %p1371 = pneg %p113
        $region50: #{tpu_custom_call.1} parent=47 // pred_check_branch
          %1373 = sbr.rel (%p1371) target = $region52
        $region51: #{tpu_custom_call.1} parent=47 // pred_region
          %s1374 = sand.u32 %s98, 1
          %s1375 = scalar_lea.sflag [#allocation6], %s1374
          %s1376 = sand.u32 %s98, 1
          %s1377 = smul.addr %s1376, 2
          %s1378 = scalar_lea.vmem [#allocation9], %s1377
          %1379 = dma.done %s1375, 32
        $region52: #{tpu_custom_call.1} parent=47 // pred_fallthru
          _
      $region48: #{tpu_custom_call.1} parent=5 // pred_fallthru
        _
    $region6: #{tpu_custom_call.1} parent=1 // loop_footer
      %s20 = sadd.s32 1, %s16
    $region7: #{tpu_custom_call.1} parent=1 // loop_footer_branch
      %15 = sbr.rel target = $region3
    $region8: #{tpu_custom_call.1} parent=1 // loop_exit
      _
    %1380 = vsyncpa [#allocation5], 1
    %s1381 = scalar_lea.sflag [#allocation5], 1
    %1382 = vsyncpa %s1381, 1
    %1383 = vsyncpa [#allocation8], 1
    %1384 = vsyncpa [#allocation6], 1
    %s1385 = scalar_lea.sflag [#allocation6], 1
    %1386 = vsyncpa %s1385, 1

</llo_original>
